<compile_context>
chip_gen: v7x
topology: tpu7x:2x2x1
jax: 0.10.0
libtpu: 0.0.40
codegen_flags: <defaults>
</compile_context>

<pallas_src>
import jax
import jax.numpy as jnp
from jax.experimental import pallas as pl
from jax.experimental.pallas import tpu as pltpu

# ---- model config (small, lane-dense) ----
B_SZ = 2             # batch
T_SEQ = 128          # sequence length
N_EMBD = 128         # embedding dim (multiple of 128 -> lane-dense)
HIDDEN = 4 * N_EMBD  # c_fc output (512)
SWI = HIDDEN // 2    # SwiGLU output (256)
RMS_EPS = 1e-6       # torchtune RMSNorm default
TILE_M = 128         # rows per grid step on multi-TC chips (v7x)


def _ffn_kernel(x_ref, gamma_ref, wg_ref, bg_ref, wv_ref, bv_ref,
                wp_ref, bp_ref, o_ref):
    """One grid step handles a tile of rows of the flattened (B*T, C) input."""
    x = x_ref[...]                                              # (TM, C) f32

    # --- RMSNorm (torchtune: x * rsqrt(mean(x^2) + eps) * scale), f32 ---
    ms = jnp.mean(x * x, axis=-1, keepdims=True)                # (TM, 1)
    xn = x * jax.lax.rsqrt(ms + RMS_EPS) * gamma_ref[...]       # gamma: (1, C)
    xn_b = xn.astype(jnp.bfloat16)                              # MXU operand

    # --- c_fc, pre-split into gate/val halves: (TM, C) @ (C, SWI) each ---
    gate = jnp.dot(xn_b, wg_ref[...],
                   preferred_element_type=jnp.float32) + bg_ref[...]
    sig = jax.nn.sigmoid(gate)                                  # EUP, overlaps val dot
    val = jnp.dot(xn_b, wv_ref[...],
                  preferred_element_type=jnp.float32) + bv_ref[...]

    # --- SwiGLU: silu(gate) * val, f32 elementwise ---
    swi = (gate * sig) * val                                    # (TM, SWI)

    # --- c_proj: (TM, SWI) @ (SWI, C) -> (TM, C) ---
    out = jnp.dot(swi.astype(jnp.bfloat16), wp_ref[...],
                  preferred_element_type=jnp.float32) + bp_ref[...]

    # Dropout(0.1) is identity in eval mode.
    o_ref[...] = out


def _pick_tile(M):
    """Single big step on 1-TC chips (v5e/v6e); 2 parallel tiles on v7x (2 TCs)."""
    try:
        kind = jax.devices()[0].device_kind.lower()
    except Exception:
        kind = ""
    if "v7" in kind and M % TILE_M == 0 and M // TILE_M >= 2:
        return TILE_M
    return M


def feed_forward(x, gamma, w_fc, b_fc, w_proj, b_proj, *, tm=None):
    B, T, C = x.shape
    M = B * T
    if tm is None:
        tm = _pick_tile(M)
    assert M % tm == 0, "B*T must be a multiple of the row tile"
    x2 = x.reshape(M, C)                                        # fold batch into M

    # Pre-split c_fc into val (first half) / gate (second half), cast weights to bf16.
    w_val = w_fc[:, :SWI].astype(jnp.bfloat16)                  # (C, SWI)
    w_gate = w_fc[:, SWI:].astype(jnp.bfloat16)                 # (C, SWI)
    b_val = b_fc[:, :SWI]                                       # f32, tiny
    b_gate = b_fc[:, SWI:]
    w_proj_b = w_proj.astype(jnp.bfloat16)                      # (SWI, C)

    const = lambda i: (0, 0)                                    # weights/bias: one block

    # Advisory cost estimate so XLA can overlap the weight HBM reads (v7x prologue).
    flops = 2 * M * C * SWI * 3                                 # 2 half c_fc dots + c_proj
    transcendentals = M * SWI                                   # sigmoid
    bytes_accessed = (M * C * 4 * 2                             # x in + out (f32)
                      + 3 * C * SWI * 2                         # bf16 weights
                      + (2 * SWI + 2 * C) * 4)                  # biases + gamma (f32)

    out2 = pl.pallas_call(
        _ffn_kernel,
        out_shape=jax.ShapeDtypeStruct((M, C), jnp.float32),
        grid_spec=pltpu.PrefetchScalarGridSpec(
            num_scalar_prefetch=0,
            grid=(M // tm,),
            in_specs=[
                pl.BlockSpec((tm, C), lambda i: (i, 0)),        # x rows
                pl.BlockSpec((1, C), const),                    # RMSNorm scale
                pl.BlockSpec((C, SWI), const),                  # W_fc gate half (bf16)
                pl.BlockSpec((1, SWI), const),                  # b_fc gate half
                pl.BlockSpec((C, SWI), const),                  # W_fc val half (bf16)
                pl.BlockSpec((1, SWI), const),                  # b_fc val half
                pl.BlockSpec((SWI, C), const),                  # W_proj (bf16)
                pl.BlockSpec((1, C), const),                    # b_proj
            ],
            out_specs=pl.BlockSpec((tm, C), lambda i: (i, 0)),
        ),
        compiler_params=pltpu.CompilerParams(
            dimension_semantics=("parallel",)),                 # 2 tiles -> 2 TCs on v7x
        cost_estimate=pl.CostEstimate(
            flops=flops, transcendentals=transcendentals,
            bytes_accessed=bytes_accessed),
    )(x2, gamma, w_gate, b_gate, w_val, b_val, w_proj_b, b_proj)
    return out2.reshape(B, T, C)


def _reference(x, gamma, w_fc, b_fc, w_proj, b_proj):
    """Pure-JAX reference mirroring the PyTorch forward (eval mode), bf16 MXU operands."""
    ms = jnp.mean(x * x, axis=-1, keepdims=True)
    xn = x * jax.lax.rsqrt(ms + RMS_EPS) * gamma
    h = jnp.dot(xn.astype(jnp.bfloat16), w_fc.astype(jnp.bfloat16),
                preferred_element_type=jnp.float32) + b_fc
    val, gate = jnp.split(h, 2, axis=-1)
    swi = jax.nn.silu(gate) * val
    return jnp.dot(swi.astype(jnp.bfloat16), w_proj.astype(jnp.bfloat16),
                   preferred_element_type=jnp.float32) + b_proj


if __name__ == "__main__":
    key = jax.random.PRNGKey(0)
    kx, kw1, kb1, kw2, kb2 = jax.random.split(key, 5)

    x = jax.random.normal(kx, (B_SZ, T_SEQ, N_EMBD), dtype=jnp.float32)

    # deterministic parameter init (synthetic; shapes match the module's __init__,
    # stored as (in_features, out_features))
    gamma = jnp.ones((1, N_EMBD), dtype=jnp.float32)                     # RMSNorm scale
    w_fc = jax.random.normal(kw1, (N_EMBD, HIDDEN), jnp.float32) * 0.02
    b_fc = jax.random.normal(kb1, (1, HIDDEN), jnp.float32) * 0.02
    w_proj = jax.random.normal(kw2, (SWI, N_EMBD), jnp.float32) * 0.02
    b_proj = jax.random.normal(kb2, (1, N_EMBD), jnp.float32) * 0.02

    out = feed_forward(x, gamma, w_fc, b_fc, w_proj, b_proj)
    out = jax.block_until_ready(out)

    ref = _reference(x, gamma, w_fc, b_fc, w_proj, b_proj)
    assert out.shape == (B_SZ, T_SEQ, N_EMBD)
    assert jnp.allclose(out, ref, atol=2e-3, rtol=2e-3), "mismatch vs JAX reference"
    print("KERNEL_OK")
</pallas_src>

<mosaic_0001>
module attributes {stable_mosaic.version = 11 : i64} {
  func.func @_ffn_kernel(%arg0: i32, %arg1: memref<256x128xf32, #tpu.memory_space<vmem>>, %arg2: memref<1x128xf32, #tpu.memory_space<vmem>>, %arg3: memref<128x256xbf16, #tpu.memory_space<vmem>>, %arg4: memref<1x256xf32, #tpu.memory_space<vmem>>, %arg5: memref<128x256xbf16, #tpu.memory_space<vmem>>, %arg6: memref<1x256xf32, #tpu.memory_space<vmem>>, %arg7: memref<256x128xbf16, #tpu.memory_space<vmem>>, %arg8: memref<1x128xf32, #tpu.memory_space<vmem>>, %arg9: memref<256x128xf32, #tpu.memory_space<vmem>>) attributes {dimension_semantics = [#tpu.dimension_semantics<parallel>], iteration_bounds = array<i64: 1>, scalar_prefetch = 0 : i64, scratch_operands = 0 : i64, tpu.core_type = #tpu.core_type<tc>, window_params = [{transform_indices = @transform_0, window_bounds = array<i64: 256, 128>}, {pipeline_mode = #tpu.pipeline_mode<synchronous>, transform_indices = @transform_1, window_bounds = array<i64: 1, 128>}, {pipeline_mode = #tpu.pipeline_mode<synchronous>, transform_indices = @transform_2, window_bounds = array<i64: 128, 256>}, {pipeline_mode = #tpu.pipeline_mode<synchronous>, transform_indices = @transform_3, window_bounds = array<i64: 1, 256>}, {pipeline_mode = #tpu.pipeline_mode<synchronous>, transform_indices = @transform_4, window_bounds = array<i64: 128, 256>}, {pipeline_mode = #tpu.pipeline_mode<synchronous>, transform_indices = @transform_5, window_bounds = array<i64: 1, 256>}, {pipeline_mode = #tpu.pipeline_mode<synchronous>, transform_indices = @transform_6, window_bounds = array<i64: 256, 128>}, {pipeline_mode = #tpu.pipeline_mode<synchronous>, transform_indices = @transform_7, window_bounds = array<i64: 1, 128>}, {transform_indices = @transform_8, window_bounds = array<i64: 256, 128>}]} {
    %c0 = arith.constant 0 : index
    %c0_0 = arith.constant 0 : index
    %0 = vector.load %arg1[%c0, %c0_0] : memref<256x128xf32, #tpu.memory_space<vmem>>, vector<256x128xf32>
    %1 = arith.mulf %0, %0 : vector<256x128xf32>
    %cst = arith.constant dense<0.000000e+00> : vector<256xf32>
    %2 = vector.multi_reduction <add>, %1, %cst [1] : vector<256x128xf32> to vector<256xf32>
    %3 = vector.shape_cast %2 : vector<256xf32> to vector<256x1xf32>
    %cst_1 = arith.constant 1.280000e+02 : f32
    %4 = vector.broadcast %cst_1 : f32 to vector<256x1xf32>
    %5 = arith.divf %3, %4 : vector<256x1xf32>
    %cst_2 = arith.constant 9.99999997E-7 : f32
    %6 = vector.broadcast %cst_2 : f32 to vector<256x1xf32>
    %7 = arith.addf %5, %6 : vector<256x1xf32>
    %8 = math.rsqrt %7 : vector<256x1xf32>
    %9 = vector.broadcast %8 : vector<256x1xf32> to vector<256x128xf32>
    %10 = arith.mulf %0, %9 : vector<256x128xf32>
    %c0_3 = arith.constant 0 : index
    %c0_4 = arith.constant 0 : index
    %11 = vector.load %arg2[%c0_3, %c0_4] : memref<1x128xf32, #tpu.memory_space<vmem>>, vector<1x128xf32>
    %12 = vector.broadcast %11 : vector<1x128xf32> to vector<256x128xf32>
    %13 = arith.mulf %10, %12 : vector<256x128xf32>
    %14 = arith.truncf %13 : vector<256x128xf32> to vector<256x128xbf16>
    %c0_5 = arith.constant 0 : index
    %c0_6 = arith.constant 0 : index
    %15 = vector.load %arg3[%c0_5, %c0_6] : memref<128x256xbf16, #tpu.memory_space<vmem>>, vector<128x256xbf16>
    %cst_7 = arith.constant dense<0.000000e+00> : vector<256x256xf32>
    %16 = tpu.matmul %14, %15, %cst_7 {dimension_numbers = #tpu.dot_dimension_numbers<[1], [0], [0], [1], [0, 0, 1, 1], [], []>} : vector<256x128xbf16>, vector<128x256xbf16>, vector<256x256xf32> -> vector<256x256xf32>
    %c0_8 = arith.constant 0 : index
    %c0_9 = arith.constant 0 : index
    %17 = vector.load %arg4[%c0_8, %c0_9] : memref<1x256xf32, #tpu.memory_space<vmem>>, vector<1x256xf32>
    %18 = vector.broadcast %17 : vector<1x256xf32> to vector<256x256xf32>
    %19 = arith.addf %16, %18 : vector<256x256xf32>
    %20 = arith.negf %19 : vector<256x256xf32>
    %21 = math.exp %20 : vector<256x256xf32>
    %cst_10 = arith.constant 1.000000e+00 : f32
    %22 = vector.broadcast %cst_10 : f32 to vector<256x256xf32>
    %23 = arith.addf %22, %21 : vector<256x256xf32>
    %24 = arith.divf %22, %23 : vector<256x256xf32>
    %c0_11 = arith.constant 0 : index
    %c0_12 = arith.constant 0 : index
    %25 = vector.load %arg5[%c0_11, %c0_12] : memref<128x256xbf16, #tpu.memory_space<vmem>>, vector<128x256xbf16>
    %cst_13 = arith.constant dense<0.000000e+00> : vector<256x256xf32>
    %26 = tpu.matmul %14, %25, %cst_13 {dimension_numbers = #tpu.dot_dimension_numbers<[1], [0], [0], [1], [0, 0, 1, 1], [], []>} : vector<256x128xbf16>, vector<128x256xbf16>, vector<256x256xf32> -> vector<256x256xf32>
    %c0_14 = arith.constant 0 : index
    %c0_15 = arith.constant 0 : index
    %27 = vector.load %arg6[%c0_14, %c0_15] : memref<1x256xf32, #tpu.memory_space<vmem>>, vector<1x256xf32>
    %28 = vector.broadcast %27 : vector<1x256xf32> to vector<256x256xf32>
    %29 = arith.addf %26, %28 : vector<256x256xf32>
    %30 = arith.mulf %19, %24 : vector<256x256xf32>
    %31 = arith.mulf %30, %29 : vector<256x256xf32>
    %32 = arith.truncf %31 : vector<256x256xf32> to vector<256x256xbf16>
    %c0_16 = arith.constant 0 : index
    %c0_17 = arith.constant 0 : index
    %33 = vector.load %arg7[%c0_16, %c0_17] : memref<256x128xbf16, #tpu.memory_space<vmem>>, vector<256x128xbf16>
    %cst_18 = arith.constant dense<0.000000e+00> : vector<256x128xf32>
    %34 = tpu.matmul %32, %33, %cst_18 {dimension_numbers = #tpu.dot_dimension_numbers<[1], [0], [0], [1], [0, 0, 1, 1], [], []>} : vector<256x256xbf16>, vector<256x128xbf16>, vector<256x128xf32> -> vector<256x128xf32>
    %c0_19 = arith.constant 0 : index
    %c0_20 = arith.constant 0 : index
    %35 = vector.load %arg8[%c0_19, %c0_20] : memref<1x128xf32, #tpu.memory_space<vmem>>, vector<1x128xf32>
    %36 = vector.broadcast %35 : vector<1x128xf32> to vector<256x128xf32>
    %37 = arith.addf %34, %36 : vector<256x128xf32>
    %c0_21 = arith.constant 0 : index
    %c0_22 = arith.constant 0 : index
    %38 = vector.load %arg9[%c0_21, %c0_22] : memref<256x128xf32, #tpu.memory_space<vmem>>, vector<256x128xf32>
    tpu.vector_store %arg9[%c0_21, %c0_22], %37 {strides = array<i32>} : memref<256x128xf32, #tpu.memory_space<vmem>>, vector<256x128xf32>,
    return
  }
  func.func @transform_0(%arg0: i32) -> (i32, i32) {
    %c0_i32 = arith.constant 0 : i32
    %c0_i32_0 = arith.constant 0 : i32
    return %arg0, %c0_i32 : i32, i32
  }
  func.func @transform_1(%arg0: i32) -> (i32, i32) {
    %c0_i32 = arith.constant 0 : i32
    %c0_i32_0 = arith.constant 0 : i32
    %c0_i32_1 = arith.constant 0 : i32
    return %c0_i32, %c0_i32_0 : i32, i32
  }
  func.func @transform_2(%arg0: i32) -> (i32, i32) {
    %c0_i32 = arith.constant 0 : i32
    %c0_i32_0 = arith.constant 0 : i32
    %c0_i32_1 = arith.constant 0 : i32
    return %c0_i32, %c0_i32_0 : i32, i32
  }
  func.func @transform_3(%arg0: i32) -> (i32, i32) {
    %c0_i32 = arith.constant 0 : i32
    %c0_i32_0 = arith.constant 0 : i32
    %c0_i32_1 = arith.constant 0 : i32
    return %c0_i32, %c0_i32_0 : i32, i32
  }
  func.func @transform_4(%arg0: i32) -> (i32, i32) {
    %c0_i32 = arith.constant 0 : i32
    %c0_i32_0 = arith.constant 0 : i32
    %c0_i32_1 = arith.constant 0 : i32
    return %c0_i32, %c0_i32_0 : i32, i32
  }
  func.func @transform_5(%arg0: i32) -> (i32, i32) {
    %c0_i32 = arith.constant 0 : i32
    %c0_i32_0 = arith.constant 0 : i32
    %c0_i32_1 = arith.constant 0 : i32
    return %c0_i32, %c0_i32_0 : i32, i32
  }
  func.func @transform_6(%arg0: i32) -> (i32, i32) {
    %c0_i32 = arith.constant 0 : i32
    %c0_i32_0 = arith.constant 0 : i32
    %c0_i32_1 = arith.constant 0 : i32
    return %c0_i32, %c0_i32_0 : i32, i32
  }
  func.func @transform_7(%arg0: i32) -> (i32, i32) {
    %c0_i32 = arith.constant 0 : i32
    %c0_i32_0 = arith.constant 0 : i32
    %c0_i32_1 = arith.constant 0 : i32
    return %c0_i32, %c0_i32_0 : i32, i32
  }
  func.func @transform_8(%arg0: i32) -> (i32, i32) {
    %c0_i32 = arith.constant 0 : i32
    %c0_i32_0 = arith.constant 0 : i32
    return %arg0, %c0_i32 : i32, i32
  }
}

</mosaic_0001>

<llo_original>
// kernel: tpu_custom_call.1
$region0: #{tpu_custom_call.1}
  #allocation0 [shape = 'u32[]', space=smem, size = 0x4, offset = 0x4, fixed_abs, tag = 'smem constant byte address 0x4 - core index']
  #allocation1 [shape = 'u32[144,128]{1,0:T(1,128)}', space=vmem, size = 0x12000, scoped, tag = 'internal scratch']
  %s0 = inlined_call_operand.hbm [shape: f32[256,128], index: 0, kind: input, shape index: {}]
  %s1 = inlined_call_operand.vmem [shape: f32[1,128], index: 1, kind: input, shape index: {}]
  %s2 = inlined_call_operand.hbm [shape: bf16[128,256], index: 2, kind: input, shape index: {}]
  %s3 = inlined_call_operand.vmem [shape: f32[1,256], index: 3, kind: input, shape index: {}]
  %s4 = inlined_call_operand.hbm [shape: bf16[128,256], index: 4, kind: input, shape index: {}]
  %s5 = inlined_call_operand.vmem [shape: f32[1,256], index: 5, kind: input, shape index: {}]
  %s6 = inlined_call_operand.hbm [shape: bf16[256,128], index: 6, kind: input, shape index: {}]
  %s7 = inlined_call_operand.vmem [shape: f32[1,128], index: 7, kind: input, shape index: {}]
  %s8 = inlined_call_operand.hbm [shape: f32[256,128], index: 8, kind: output, shape index: {}]
  %s9 = sld [smem:[#allocation0]]
  $region58: #{tpu_custom_call.1} parent=0
    _
  %s11 = ssub.s32 1, %s9
  %s12 = scalar_select 0, %s11, %s9
  $region1: #{tpu_custom_call.1} parent=0
    #allocation2 [shape = 'u8[131072]{0}', space=vmem, size = 0x20000, scoped, tag = 'input window, operand 0, single buffered']
    #allocation3 [shape = 's32[1]{0}', space=sflag, size = 0x4, scoped, tag = 'scoped memory for tpu_custom_call.1']
    #allocation4 [shape = 's32[1]{0}', space=sflag, size = 0x4, scoped, tag = 'scoped memory for tpu_custom_call.1']
    #allocation5 [shape = 'u8[65536]{0}', space=vmem, size = 0x10000, scoped, tag = 'input window, operand 2, single buffered']
    #allocation6 [shape = 's32[1]{0}', space=sflag, size = 0x4, scoped, tag = 'scoped memory for tpu_custom_call.1']
    #allocation7 [shape = 'u8[65536]{0}', space=vmem, size = 0x10000, scoped, tag = 'input window, operand 4, single buffered']
    #allocation8 [shape = 'u8[65536]{0}', space=vmem, size = 0x10000, scoped, tag = 'input window, operand 6, single buffered']
    #allocation9 [shape = 's32[1]{0}', space=sflag, size = 0x4, scoped, tag = 'scoped memory for tpu_custom_call.1']
    #allocation10 [shape = 'u8[131072]{0}', space=vmem, size = 0x20000, scoped, tag = 'output window, operand 0, single buffered']
    %13 = vsyncpa [#allocation3], 0
    %14 = vsyncpa [#allocation6], 0
    %15 = vsyncpa [#allocation9], 0
    %16 = vsyncpa [#allocation4], 0
    // Predicated region
    $region2: #{tpu_custom_call.1} parent=1 // pred_check
      _
    $region3: #{tpu_custom_call.1} parent=1 // pred_check_branch
      %18 = sbr.rel (0) target = $region5
    $region4: #{tpu_custom_call.1} parent=1 // pred_region
      %s20 = ssub.s32 4096, 4096
      %21 = vsyncadd [#allocation3], %s20
      %s22 = sshll.u32 [#allocation2], 4
      %s23 = int_to_ptr.vmem [resolvable:$true] %s22
      %28 = dma.hbm_to_vmem [thread:$0]  %s0, 4096, %s23, [#allocation3], 128, 128, 8
    $region5: #{tpu_custom_call.1} parent=1 // pred_fallthru
      _
    // Predicated region
    $region6: #{tpu_custom_call.1} parent=1 // pred_check
      _
    $region7: #{tpu_custom_call.1} parent=1 // pred_check_branch
      %30 = sbr.rel (0) target = $region9
    $region8: #{tpu_custom_call.1} parent=1 // pred_region
      _
    $region9: #{tpu_custom_call.1} parent=1 // pred_fallthru
      _
    // Predicated region
    $region10: #{tpu_custom_call.1} parent=1 // pred_check
      _
    $region11: #{tpu_custom_call.1} parent=1 // pred_check_branch
      %32 = sbr.rel (0) target = $region13
    $region12: #{tpu_custom_call.1} parent=1 // pred_region
      %s34 = ssub.s32 2048, 2048
      %35 = vsyncadd [#allocation6], %s34
      %s36 = sshll.u32 [#allocation5], 4
      %s37 = int_to_ptr.vmem [resolvable:$true] %s36
      %42 = dma.hbm_to_vmem [thread:$0]  %s2, 2048, %s37, [#allocation6], 128, 128, 8
    $region13: #{tpu_custom_call.1} parent=1 // pred_fallthru
      _
    // Predicated region
    $region14: #{tpu_custom_call.1} parent=1 // pred_check
      _
    $region15: #{tpu_custom_call.1} parent=1 // pred_check_branch
      %44 = sbr.rel (0) target = $region17
    $region16: #{tpu_custom_call.1} parent=1 // pred_region
      _
    $region17: #{tpu_custom_call.1} parent=1 // pred_fallthru
      _
    // Predicated region
    $region18: #{tpu_custom_call.1} parent=1 // pred_check
      _
    $region19: #{tpu_custom_call.1} parent=1 // pred_check_branch
      %46 = sbr.rel (0) target = $region21
    $region20: #{tpu_custom_call.1} parent=1 // pred_region
      %s48 = ssub.s32 2048, 2048
      %49 = vsyncadd [#allocation6], %s48
      %s50 = sshll.u32 [#allocation7], 4
      %s51 = int_to_ptr.vmem [resolvable:$true] %s50
      %56 = dma.hbm_to_vmem [thread:$0]  %s4, 2048, %s51, [#allocation6], 128, 128, 8
    $region21: #{tpu_custom_call.1} parent=1 // pred_fallthru
      _
    // Predicated region
    $region22: #{tpu_custom_call.1} parent=1 // pred_check
      _
    $region23: #{tpu_custom_call.1} parent=1 // pred_check_branch
      %58 = sbr.rel (0) target = $region25
    $region24: #{tpu_custom_call.1} parent=1 // pred_region
      _
    $region25: #{tpu_custom_call.1} parent=1 // pred_fallthru
      _
    // Predicated region
    $region26: #{tpu_custom_call.1} parent=1 // pred_check
      _
    $region27: #{tpu_custom_call.1} parent=1 // pred_check_branch
      %60 = sbr.rel (0) target = $region29
    $region28: #{tpu_custom_call.1} parent=1 // pred_region
      %s62 = ssub.s32 2048, 2048
      %63 = vsyncadd [#allocation9], %s62
      %s64 = sshll.u32 [#allocation8], 4
      %s65 = int_to_ptr.vmem [resolvable:$true] %s64
      %70 = dma.hbm_to_vmem [thread:$0]  %s6, 2048, %s65, [#allocation9], 64, 64, 4
    $region29: #{tpu_custom_call.1} parent=1 // pred_fallthru
      _
    // Predicated region
    $region30: #{tpu_custom_call.1} parent=1 // pred_check
      _
    $region31: #{tpu_custom_call.1} parent=1 // pred_check_branch
      %72 = sbr.rel (0) target = $region33
    $region32: #{tpu_custom_call.1} parent=1 // pred_region
      _
    $region33: #{tpu_custom_call.1} parent=1 // pred_fallthru
      _
    // Predicated region
    $region34: #{tpu_custom_call.1} parent=1 // pred_check
      _
    $region35: #{tpu_custom_call.1} parent=1 // pred_check_branch
      %74 = sbr.rel (0) target = $region37
    $region36: #{tpu_custom_call.1} parent=1 // pred_region
      %75 = dma.done [#allocation3], 4096
    $region37: #{tpu_custom_call.1} parent=1 // pred_fallthru
      _
    // Predicated region
    $region38: #{tpu_custom_call.1} parent=1 // pred_check
      _
    $region39: #{tpu_custom_call.1} parent=1 // pred_check_branch
      %77 = sbr.rel (0) target = $region41
    $region40: #{tpu_custom_call.1} parent=1 // pred_region
      %78 = dma.done [#allocation6], 2048
    $region41: #{tpu_custom_call.1} parent=1 // pred_fallthru
      _
    // Predicated region
    $region42: #{tpu_custom_call.1} parent=1 // pred_check
      _
    $region43: #{tpu_custom_call.1} parent=1 // pred_check_branch
      %80 = sbr.rel (0) target = $region45
    $region44: #{tpu_custom_call.1} parent=1 // pred_region
      %81 = dma.done [#allocation6], 2048
    $region45: #{tpu_custom_call.1} parent=1 // pred_fallthru
      _
    // Predicated region
    $region46: #{tpu_custom_call.1} parent=1 // pred_check
      _
    $region47: #{tpu_custom_call.1} parent=1 // pred_check_branch
      %83 = sbr.rel (0) target = $region49
    $region48: #{tpu_custom_call.1} parent=1 // pred_region
      %84 = dma.done [#allocation9], 2048
    $region49: #{tpu_custom_call.1} parent=1 // pred_fallthru
      _
    %v86 = vld [vmem:[#allocation2] sm:$0xff]
    %v87 = vld [vmem:[#allocation2 + $0x8] sm:$0xff]
    %v88 = vld [vmem:[#allocation2 + $0x10] sm:$0xff]
    %v89 = vld [vmem:[#allocation2 + $0x18] sm:$0xff]
    %v90 = vld [vmem:[#allocation2 + $0x20] sm:$0xff]
    %v91 = vld [vmem:[#allocation2 + $0x28] sm:$0xff]
    %v92 = vld [vmem:[#allocation2 + $0x30] sm:$0xff]
    %v93 = vld [vmem:[#allocation2 + $0x38] sm:$0xff]
    %v94 = vld [vmem:[#allocation2 + $0x40] sm:$0xff]
    %v95 = vld [vmem:[#allocation2 + $0x48] sm:$0xff]
    %v96 = vld [vmem:[#allocation2 + $0x50] sm:$0xff]
    %v97 = vld [vmem:[#allocation2 + $0x58] sm:$0xff]
    %v98 = vld [vmem:[#allocation2 + $0x60] sm:$0xff]
    %v99 = vld [vmem:[#allocation2 + $0x68] sm:$0xff]
    %v100 = vld [vmem:[#allocation2 + $0x70] sm:$0xff]
    %v101 = vld [vmem:[#allocation2 + $0x78] sm:$0xff]
    %v102 = vld [vmem:[#allocation2 + $0x80] sm:$0xff]
    %v103 = vld [vmem:[#allocation2 + $0x88] sm:$0xff]
    %v104 = vld [vmem:[#allocation2 + $0x90] sm:$0xff]
    %v105 = vld [vmem:[#allocation2 + $0x98] sm:$0xff]
    %v106 = vld [vmem:[#allocation2 + $0xa0] sm:$0xff]
    %v107 = vld [vmem:[#allocation2 + $0xa8] sm:$0xff]
    %v108 = vld [vmem:[#allocation2 + $0xb0] sm:$0xff]
    %v109 = vld [vmem:[#allocation2 + $0xb8] sm:$0xff]
    %v110 = vld [vmem:[#allocation2 + $0xc0] sm:$0xff]
    %v111 = vld [vmem:[#allocation2 + $0xc8] sm:$0xff]
    %v112 = vld [vmem:[#allocation2 + $0xd0] sm:$0xff]
    %v113 = vld [vmem:[#allocation2 + $0xd8] sm:$0xff]
    %v114 = vld [vmem:[#allocation2 + $0xe0] sm:$0xff]
    %v115 = vld [vmem:[#allocation2 + $0xe8] sm:$0xff]
    %v116 = vld [vmem:[#allocation2 + $0xf0] sm:$0xff]
    %v117 = vld [vmem:[#allocation2 + $0xf8] sm:$0xff]
    %v118 = vmul.f32 %v86, %v86
    %v119 = vmul.f32 %v87, %v87
    %v120 = vmul.f32 %v88, %v88
    %v121 = vmul.f32 %v89, %v89
    %v122 = vmul.f32 %v90, %v90
    %v123 = vmul.f32 %v91, %v91
    %v124 = vmul.f32 %v92, %v92
    %v125 = vmul.f32 %v93, %v93
    %v126 = vmul.f32 %v94, %v94
    %v127 = vmul.f32 %v95, %v95
    %v128 = vmul.f32 %v96, %v96
    %v129 = vmul.f32 %v97, %v97
    %v130 = vmul.f32 %v98, %v98
    %v131 = vmul.f32 %v99, %v99
    %v132 = vmul.f32 %v100, %v100
    %v133 = vmul.f32 %v101, %v101
    %v134 = vmul.f32 %v102, %v102
    %v135 = vmul.f32 %v103, %v103
    %v136 = vmul.f32 %v104, %v104
    %v137 = vmul.f32 %v105, %v105
    %v138 = vmul.f32 %v106, %v106
    %v139 = vmul.f32 %v107, %v107
    %v140 = vmul.f32 %v108, %v108
    %v141 = vmul.f32 %v109, %v109
    %v142 = vmul.f32 %v110, %v110
    %v143 = vmul.f32 %v111, %v111
    %v144 = vmul.f32 %v112, %v112
    %v145 = vmul.f32 %v113, %v113
    %v146 = vmul.f32 %v114, %v114
    %v147 = vmul.f32 %v115, %v115
    %v148 = vmul.f32 %v116, %v116
    %v149 = vmul.f32 %v117, %v117
    %150 = vadd.xlane.f32.xlu0 %v118
    %v151 = vpop.xlane.xlu0 %150
    %152 = vadd.xlane.f32.xlu0 %v119
    %v153 = vpop.xlane.xlu0 %152
    %154 = vadd.xlane.f32.xlu0 %v120
    %v155 = vpop.xlane.xlu0 %154
    %156 = vadd.xlane.f32.xlu0 %v121
    %v157 = vpop.xlane.xlu0 %156
    %158 = vadd.xlane.f32.xlu0 %v122
    %v159 = vpop.xlane.xlu0 %158
    %160 = vadd.xlane.f32.xlu0 %v123
    %v161 = vpop.xlane.xlu0 %160
    %162 = vadd.xlane.f32.xlu0 %v124
    %v163 = vpop.xlane.xlu0 %162
    %164 = vadd.xlane.f32.xlu0 %v125
    %v165 = vpop.xlane.xlu0 %164
    %166 = vadd.xlane.f32.xlu0 %v126
    %v167 = vpop.xlane.xlu0 %166
    %168 = vadd.xlane.f32.xlu0 %v127
    %v169 = vpop.xlane.xlu0 %168
    %170 = vadd.xlane.f32.xlu0 %v128
    %v171 = vpop.xlane.xlu0 %170
    %172 = vadd.xlane.f32.xlu0 %v129
    %v173 = vpop.xlane.xlu0 %172
    %174 = vadd.xlane.f32.xlu0 %v130
    %v175 = vpop.xlane.xlu0 %174
    %176 = vadd.xlane.f32.xlu0 %v131
    %v177 = vpop.xlane.xlu0 %176
    %178 = vadd.xlane.f32.xlu0 %v132
    %v179 = vpop.xlane.xlu0 %178
    %180 = vadd.xlane.f32.xlu0 %v133
    %v181 = vpop.xlane.xlu0 %180
    %182 = vadd.xlane.f32.xlu0 %v134
    %v183 = vpop.xlane.xlu0 %182
    %184 = vadd.xlane.f32.xlu0 %v135
    %v185 = vpop.xlane.xlu0 %184
    %186 = vadd.xlane.f32.xlu0 %v136
    %v187 = vpop.xlane.xlu0 %186
    %188 = vadd.xlane.f32.xlu0 %v137
    %v189 = vpop.xlane.xlu0 %188
    %190 = vadd.xlane.f32.xlu0 %v138
    %v191 = vpop.xlane.xlu0 %190
    %192 = vadd.xlane.f32.xlu0 %v139
    %v193 = vpop.xlane.xlu0 %192
    %194 = vadd.xlane.f32.xlu0 %v140
    %v195 = vpop.xlane.xlu0 %194
    %196 = vadd.xlane.f32.xlu0 %v141
    %v197 = vpop.xlane.xlu0 %196
    %198 = vadd.xlane.f32.xlu0 %v142
    %v199 = vpop.xlane.xlu0 %198
    %200 = vadd.xlane.f32.xlu0 %v143
    %v201 = vpop.xlane.xlu0 %200
    %202 = vadd.xlane.f32.xlu0 %v144
    %v203 = vpop.xlane.xlu0 %202
    %204 = vadd.xlane.f32.xlu0 %v145
    %v205 = vpop.xlane.xlu0 %204
    %206 = vadd.xlane.f32.xlu0 %v146
    %v207 = vpop.xlane.xlu0 %206
    %208 = vadd.xlane.f32.xlu0 %v147
    %v209 = vpop.xlane.xlu0 %208
    %210 = vadd.xlane.f32.xlu0 %v148
    %v211 = vpop.xlane.xlu0 %210
    %212 = vadd.xlane.f32.xlu0 %v149
    %v213 = vpop.xlane.xlu0 %212
    %v214 = vrcp.pop 128.0
    %v215 = vmul.f32 %v151, %v214
    %v216 = vmul.f32 %v153, %v214
    %v217 = vmul.f32 %v155, %v214
    %v218 = vmul.f32 %v157, %v214
    %v219 = vmul.f32 %v159, %v214
    %v220 = vmul.f32 %v161, %v214
    %v221 = vmul.f32 %v163, %v214
    %v222 = vmul.f32 %v165, %v214
    %v223 = vmul.f32 %v167, %v214
    %v224 = vmul.f32 %v169, %v214
    %v225 = vmul.f32 %v171, %v214
    %v226 = vmul.f32 %v173, %v214
    %v227 = vmul.f32 %v175, %v214
    %v228 = vmul.f32 %v177, %v214
    %v229 = vmul.f32 %v179, %v214
    %v230 = vmul.f32 %v181, %v214
    %v231 = vmul.f32 %v183, %v214
    %v232 = vmul.f32 %v185, %v214
    %v233 = vmul.f32 %v187, %v214
    %v234 = vmul.f32 %v189, %v214
    %v235 = vmul.f32 %v191, %v214
    %v236 = vmul.f32 %v193, %v214
    %v237 = vmul.f32 %v195, %v214
    %v238 = vmul.f32 %v197, %v214
    %v239 = vmul.f32 %v199, %v214
    %v240 = vmul.f32 %v201, %v214
    %v241 = vmul.f32 %v203, %v214
    %v242 = vmul.f32 %v205, %v214
    %v243 = vmul.f32 %v207, %v214
    %v244 = vmul.f32 %v209, %v214
    %v245 = vmul.f32 %v211, %v214
    %v246 = vmul.f32 %v213, %v214
    %v247 = vadd.f32 %v215, 1e-06
    %v248 = vadd.f32 %v216, 1e-06
    %v249 = vadd.f32 %v217, 1e-06
    %v250 = vadd.f32 %v218, 1e-06
    %v251 = vadd.f32 %v219, 1e-06
    %v252 = vadd.f32 %v220, 1e-06
    %v253 = vadd.f32 %v221, 1e-06
    %v254 = vadd.f32 %v222, 1e-06
    %v255 = vadd.f32 %v223, 1e-06
    %v256 = vadd.f32 %v224, 1e-06
    %v257 = vadd.f32 %v225, 1e-06
    %v258 = vadd.f32 %v226, 1e-06
    %v259 = vadd.f32 %v227, 1e-06
    %v260 = vadd.f32 %v228, 1e-06
    %v261 = vadd.f32 %v229, 1e-06
    %v262 = vadd.f32 %v230, 1e-06
    %v263 = vadd.f32 %v231, 1e-06
    %v264 = vadd.f32 %v232, 1e-06
    %v265 = vadd.f32 %v233, 1e-06
    %v266 = vadd.f32 %v234, 1e-06
    %v267 = vadd.f32 %v235, 1e-06
    %v268 = vadd.f32 %v236, 1e-06
    %v269 = vadd.f32 %v237, 1e-06
    %v270 = vadd.f32 %v238, 1e-06
    %v271 = vadd.f32 %v239, 1e-06
    %v272 = vadd.f32 %v240, 1e-06
    %v273 = vadd.f32 %v241, 1e-06
    %v274 = vadd.f32 %v242, 1e-06
    %v275 = vadd.f32 %v243, 1e-06
    %v276 = vadd.f32 %v244, 1e-06
    %v277 = vadd.f32 %v245, 1e-06
    %v278 = vadd.f32 %v246, 1e-06
    %v279 = vrsqrt.pop %v247
    %v280 = vrsqrt.pop %v248
    %v281 = vrsqrt.pop %v249
    %v282 = vrsqrt.pop %v250
    %v283 = vrsqrt.pop %v251
    %v284 = vrsqrt.pop %v252
    %v285 = vrsqrt.pop %v253
    %v286 = vrsqrt.pop %v254
    %v287 = vrsqrt.pop %v255
    %v288 = vrsqrt.pop %v256
    %v289 = vrsqrt.pop %v257
    %v290 = vrsqrt.pop %v258
    %v291 = vrsqrt.pop %v259
    %v292 = vrsqrt.pop %v260
    %v293 = vrsqrt.pop %v261
    %v294 = vrsqrt.pop %v262
    %v295 = vrsqrt.pop %v263
    %v296 = vrsqrt.pop %v264
    %v297 = vrsqrt.pop %v265
    %v298 = vrsqrt.pop %v266
    %v299 = vrsqrt.pop %v267
    %v300 = vrsqrt.pop %v268
    %v301 = vrsqrt.pop %v269
    %v302 = vrsqrt.pop %v270
    %v303 = vrsqrt.pop %v271
    %v304 = vrsqrt.pop %v272
    %v305 = vrsqrt.pop %v273
    %v306 = vrsqrt.pop %v274
    %v307 = vrsqrt.pop %v275
    %v308 = vrsqrt.pop %v276
    %v309 = vrsqrt.pop %v277
    %v310 = vrsqrt.pop %v278
    %v311 = vmul.f32 %v86, %v279
    %v312 = vmul.f32 %v87, %v280
    %v313 = vmul.f32 %v88, %v281
    %v314 = vmul.f32 %v89, %v282
    %v315 = vmul.f32 %v90, %v283
    %v316 = vmul.f32 %v91, %v284
    %v317 = vmul.f32 %v92, %v285
    %v318 = vmul.f32 %v93, %v286
    %v319 = vmul.f32 %v94, %v287
    %v320 = vmul.f32 %v95, %v288
    %v321 = vmul.f32 %v96, %v289
    %v322 = vmul.f32 %v97, %v290
    %v323 = vmul.f32 %v98, %v291
    %v324 = vmul.f32 %v99, %v292
    %v325 = vmul.f32 %v100, %v293
    %v326 = vmul.f32 %v101, %v294
    %v327 = vmul.f32 %v102, %v295
    %v328 = vmul.f32 %v103, %v296
    %v329 = vmul.f32 %v104, %v297
    %v330 = vmul.f32 %v105, %v298
    %v331 = vmul.f32 %v106, %v299
    %v332 = vmul.f32 %v107, %v300
    %v333 = vmul.f32 %v108, %v301
    %v334 = vmul.f32 %v109, %v302
    %v335 = vmul.f32 %v110, %v303
    %v336 = vmul.f32 %v111, %v304
    %v337 = vmul.f32 %v112, %v305
    %v338 = vmul.f32 %v113, %v306
    %v339 = vmul.f32 %v114, %v307
    %v340 = vmul.f32 %v115, %v308
    %v341 = vmul.f32 %v116, %v309
    %v342 = vmul.f32 %v117, %v310
    %v343 = vld [vmem:[%s1] sm:$0x1]
    %v345 = vlaneseq
    %v346 = vshrl.u32 %v345, 7
    %v347 = vsub.s32 0, %v346
    %v348 = vrot.slane %v343, %v347
    %v350 = vmul.f32 %v311, %v348
    %v351 = vmul.f32 %v312, %v348
    %v352 = vmul.f32 %v313, %v348
    %v353 = vmul.f32 %v314, %v348
    %v354 = vmul.f32 %v315, %v348
    %v355 = vmul.f32 %v316, %v348
    %v356 = vmul.f32 %v317, %v348
    %v357 = vmul.f32 %v318, %v348
    %v358 = vmul.f32 %v319, %v348
    %v359 = vmul.f32 %v320, %v348
    %v360 = vmul.f32 %v321, %v348
    %v361 = vmul.f32 %v322, %v348
    %v362 = vmul.f32 %v323, %v348
    %v363 = vmul.f32 %v324, %v348
    %v364 = vmul.f32 %v325, %v348
    %v365 = vmul.f32 %v326, %v348
    %v366 = vmul.f32 %v327, %v348
    %v367 = vmul.f32 %v328, %v348
    %v368 = vmul.f32 %v329, %v348
    %v369 = vmul.f32 %v330, %v348
    %v370 = vmul.f32 %v331, %v348
    %v371 = vmul.f32 %v332, %v348
    %v372 = vmul.f32 %v333, %v348
    %v373 = vmul.f32 %v334, %v348
    %v374 = vmul.f32 %v335, %v348
    %v375 = vmul.f32 %v336, %v348
    %v376 = vmul.f32 %v337, %v348
    %v377 = vmul.f32 %v338, %v348
    %v378 = vmul.f32 %v339, %v348
    %v379 = vmul.f32 %v340, %v348
    %v380 = vmul.f32 %v341, %v348
    %v381 = vmul.f32 %v342, %v348
    %v382 = vpack.c.bf16 %v351, %v350
    %v383 = vpack.c.bf16 %v353, %v352
    %v384 = vpack.c.bf16 %v355, %v354
    %v385 = vpack.c.bf16 %v357, %v356
    %v386 = vpack.c.bf16 %v359, %v358
    %v387 = vpack.c.bf16 %v361, %v360
    %v388 = vpack.c.bf16 %v363, %v362
    %v389 = vpack.c.bf16 %v365, %v364
    %v390 = vpack.c.bf16 %v367, %v366
    %v391 = vpack.c.bf16 %v369, %v368
    %v392 = vpack.c.bf16 %v371, %v370
    %v393 = vpack.c.bf16 %v373, %v372
    %v394 = vpack.c.bf16 %v375, %v374
    %v395 = vpack.c.bf16 %v377, %v376
    %v396 = vpack.c.bf16 %v379, %v378
    %v397 = vpack.c.bf16 %v381, %v380
    %v398 = vld [vmem:[#allocation5] sm:$0xff]
    %v399 = vld [vmem:[#allocation5 + $0x8] sm:$0xff]
    %v400 = vld [vmem:[#allocation5 + $0x10] sm:$0xff]
    %v401 = vld [vmem:[#allocation5 + $0x18] sm:$0xff]
    %v402 = vld [vmem:[#allocation5 + $0x20] sm:$0xff]
    %v403 = vld [vmem:[#allocation5 + $0x28] sm:$0xff]
    %v404 = vld [vmem:[#allocation5 + $0x30] sm:$0xff]
    %v405 = vld [vmem:[#allocation5 + $0x38] sm:$0xff]
    %v406 = vld [vmem:[#allocation5 + $0x40] sm:$0xff]
    %v407 = vld [vmem:[#allocation5 + $0x48] sm:$0xff]
    %v408 = vld [vmem:[#allocation5 + $0x50] sm:$0xff]
    %v409 = vld [vmem:[#allocation5 + $0x58] sm:$0xff]
    %v410 = vld [vmem:[#allocation5 + $0x60] sm:$0xff]
    %v411 = vld [vmem:[#allocation5 + $0x68] sm:$0xff]
    %v412 = vld [vmem:[#allocation5 + $0x70] sm:$0xff]
    %v413 = vld [vmem:[#allocation5 + $0x78] sm:$0xff]
    %v414 = vld [vmem:[%s3] sm:$0x3]
    %v416 = vlaneseq
    %v417 = vshrl.u32 %v416, 7
    %v418 = vsub.s32 0, %v417
    %v419 = vrot.slane %v414, %v418
    %v420 = vlaneseq
    %v421 = vshrl.u32 %v420, 7
    %v422 = vsub.s32 1, %v421
    %v423 = vrot.slane %v414, %v422
    %v442 = vunpack.c.l.b16 %v398
    %v443 = vunpack.c.h.b16 %v398
    %v444 = vunpack.c.l.b16 %v399
    %v445 = vunpack.c.h.b16 %v399
    %v446 = vunpack.c.l.b16 %v400
    %v447 = vunpack.c.h.b16 %v400
    %v448 = vunpack.c.l.b16 %v401
    %v449 = vunpack.c.h.b16 %v401
    %v450 = vunpack.c.l.b16 %v402
    %v451 = vunpack.c.h.b16 %v402
    %v452 = vunpack.c.l.b16 %v403
    %v453 = vunpack.c.h.b16 %v403
    %v454 = vunpack.c.l.b16 %v404
    %v455 = vunpack.c.h.b16 %v404
    %v456 = vunpack.c.l.b16 %v405
    %v457 = vunpack.c.h.b16 %v405
    %v458 = vunpack.c.l.b16 %v406
    %v459 = vunpack.c.h.b16 %v406
    %v460 = vunpack.c.l.b16 %v407
    %v461 = vunpack.c.h.b16 %v407
    %v462 = vunpack.c.l.b16 %v408
    %v463 = vunpack.c.h.b16 %v408
    %v464 = vunpack.c.l.b16 %v409
    %v465 = vunpack.c.h.b16 %v409
    %v466 = vunpack.c.l.b16 %v410
    %v467 = vunpack.c.h.b16 %v410
    %v468 = vunpack.c.l.b16 %v411
    %v469 = vunpack.c.h.b16 %v411
    %v470 = vunpack.c.l.b16 %v412
    %v471 = vunpack.c.h.b16 %v412
    %v472 = vunpack.c.l.b16 %v413
    %v473 = vunpack.c.h.b16 %v413
    %v474 = vpack.c.b16 %v444, %v442
    %v475 = vpack.c.b16 %v445, %v443
    %v476 = vpack.c.b16 %v448, %v446
    %v477 = vpack.c.b16 %v449, %v447
    %v478 = vpack.c.b16 %v452, %v450
    %v479 = vpack.c.b16 %v453, %v451
    %v480 = vpack.c.b16 %v456, %v454
    %v481 = vpack.c.b16 %v457, %v455
    %v482 = vpack.c.b16 %v460, %v458
    %v483 = vpack.c.b16 %v461, %v459
    %v484 = vpack.c.b16 %v464, %v462
    %v485 = vpack.c.b16 %v465, %v463
    %v486 = vpack.c.b16 %v468, %v466
    %v487 = vpack.c.b16 %v469, %v467
    %v488 = vpack.c.b16 %v472, %v470
    %v489 = vpack.c.b16 %v473, %v471
    %506 = vmatprep.subr.bf16.mxu0 %v475
    %507 = vmatpush1.bf16.msra.mxu0 %v474
    %508 = vmatprep.subr.bf16.mxu0 %v477
    %509 = vmatpush1.bf16.msra.mxu0 %v476
    %510 = vmatprep.subr.bf16.mxu0 %v479
    %511 = vmatpush1.bf16.msra.mxu0 %v478
    %512 = vmatprep.subr.bf16.mxu0 %v481
    %513 = vmatpush1.bf16.msra.mxu0 %v480
    %514 = vmatprep.subr.bf16.mxu0 %v483
    %515 = vmatpush1.bf16.msra.mxu0 %v482
    %516 = vmatprep.subr.bf16.mxu0 %v485
    %517 = vmatpush1.bf16.msra.mxu0 %v484
    %518 = vmatprep.subr.bf16.mxu0 %v487
    %519 = vmatpush1.bf16.msra.mxu0 %v486
    %520 = vmatprep.subr.bf16.mxu0 %v489
    %521 = vmatpush1.bf16.msra.mxu0 %v488
    %522 = vmatprep.subr.bf16.mxu0 0
    %523 = vmatpush1.bf16.msra.mxu0 0
    %524 = vmatprep.subr.bf16.mxu0 0
    %525 = vmatpush1.bf16.msra.mxu0 0
    %526 = vmatprep.subr.bf16.mxu0 0
    %527 = vmatpush1.bf16.msra.mxu0 0
    %528 = vmatprep.subr.bf16.mxu0 0
    %529 = vmatpush1.bf16.msra.mxu0 0
    %530 = vmatprep.subr.bf16.mxu0 0
    %531 = vmatpush1.bf16.msra.mxu0 0
    %532 = vmatprep.subr.bf16.mxu0 0
    %533 = vmatpush1.bf16.msra.mxu0 0
    %534 = vmatprep.subr.bf16.mxu0 0
    %535 = vmatpush1.bf16.msra.mxu0 0
    %536 = vmatprep.subr.bf16.mxu0 0
    %537 = vmatpush1.bf16.msra.mxu0 0
    %538 = vmatprep.mubr.bf16.mxu0 0
    %539 = vmatmul.mubr.bf16.gmra.mrb[0].mxu0 %v382
    %v540 = vpop.f32.mrb[0].mxu0
    %v541 = vadd.f32 %v419, %v540
    %v542 = vpop.f32.mrb[0].mxu0
    %v543 = vadd.f32 %v423, %v542
    %v544 = vpop.f32.mrb[0].mxu0
    %v545 = vadd.f32 %v419, %v544
    %v546 = vpop.f32.mrb[0].mxu0
    %v547 = vadd.f32 %v423, %v546
    %548 = vmatprep.mubr.bf16.mxu0 0
    %549 = vmatmul.mubr.bf16.gmra.mrb[0].mxu0 %v383
    %v550 = vpop.f32.mrb[0].mxu0
    %v551 = vadd.f32 %v419, %v550
    %v552 = vpop.f32.mrb[0].mxu0
    %v553 = vadd.f32 %v423, %v552
    %v554 = vpop.f32.mrb[0].mxu0
    %v555 = vadd.f32 %v419, %v554
    %v556 = vpop.f32.mrb[0].mxu0
    %v557 = vadd.f32 %v423, %v556
    %558 = vmatprep.mubr.bf16.mxu0 0
    %559 = vmatmul.mubr.bf16.gmra.mrb[0].mxu0 %v384
    %v560 = vpop.f32.mrb[0].mxu0
    %v561 = vadd.f32 %v419, %v560
    %v562 = vpop.f32.mrb[0].mxu0
    %v563 = vadd.f32 %v423, %v562
    %v564 = vpop.f32.mrb[0].mxu0
    %v565 = vadd.f32 %v419, %v564
    %v566 = vpop.f32.mrb[0].mxu0
    %v567 = vadd.f32 %v423, %v566
    %568 = vmatprep.mubr.bf16.mxu0 0
    %569 = vmatmul.mubr.bf16.gmra.mrb[0].mxu0 %v385
    %v570 = vpop.f32.mrb[0].mxu0
    %v571 = vadd.f32 %v419, %v570
    %v572 = vpop.f32.mrb[0].mxu0
    %v573 = vadd.f32 %v423, %v572
    %v574 = vpop.f32.mrb[0].mxu0
    %v575 = vadd.f32 %v419, %v574
    %v576 = vpop.f32.mrb[0].mxu0
    %v577 = vadd.f32 %v423, %v576
    %578 = vmatprep.mubr.bf16.mxu0 0
    %579 = vmatmul.mubr.bf16.gmra.mrb[0].mxu0 %v386
    %v580 = vpop.f32.mrb[0].mxu0
    %v581 = vadd.f32 %v419, %v580
    %v582 = vpop.f32.mrb[0].mxu0
    %v583 = vadd.f32 %v423, %v582
    %v584 = vpop.f32.mrb[0].mxu0
    %v585 = vadd.f32 %v419, %v584
    %v586 = vpop.f32.mrb[0].mxu0
    %v587 = vadd.f32 %v423, %v586
    %588 = vmatprep.mubr.bf16.mxu0 0
    %589 = vmatmul.mubr.bf16.gmra.mrb[0].mxu0 %v387
    %v590 = vpop.f32.mrb[0].mxu0
    %v591 = vadd.f32 %v419, %v590
    %v592 = vpop.f32.mrb[0].mxu0
    %v593 = vadd.f32 %v423, %v592
    %v594 = vpop.f32.mrb[0].mxu0
    %v595 = vadd.f32 %v419, %v594
    %v596 = vpop.f32.mrb[0].mxu0
    %v597 = vadd.f32 %v423, %v596
    %598 = vmatprep.mubr.bf16.mxu0 0
    %599 = vmatmul.mubr.bf16.gmra.mrb[0].mxu0 %v388
    %v600 = vpop.f32.mrb[0].mxu0
    %v601 = vadd.f32 %v419, %v600
    %v602 = vpop.f32.mrb[0].mxu0
    %v603 = vadd.f32 %v423, %v602
    %v604 = vpop.f32.mrb[0].mxu0
    %v605 = vadd.f32 %v419, %v604
    %v606 = vpop.f32.mrb[0].mxu0
    %v607 = vadd.f32 %v423, %v606
    %608 = vmatprep.mubr.bf16.mxu0 0
    %609 = vmatmul.mubr.bf16.gmra.mrb[0].mxu0 %v389
    %v610 = vpop.f32.mrb[0].mxu0
    %v611 = vadd.f32 %v419, %v610
    %v612 = vpop.f32.mrb[0].mxu0
    %v613 = vadd.f32 %v423, %v612
    %v614 = vpop.f32.mrb[0].mxu0
    %v615 = vadd.f32 %v419, %v614
    %v616 = vpop.f32.mrb[0].mxu0
    %v617 = vadd.f32 %v423, %v616
    %618 = vmatprep.mubr.bf16.mxu0 0
    %619 = vmatmul.mubr.bf16.gmra.mrb[0].mxu0 %v390
    %v620 = vpop.f32.mrb[0].mxu0
    %v621 = vadd.f32 %v419, %v620
    %v622 = vpop.f32.mrb[0].mxu0
    %v623 = vadd.f32 %v423, %v622
    %v624 = vpop.f32.mrb[0].mxu0
    %v625 = vadd.f32 %v419, %v624
    %v626 = vpop.f32.mrb[0].mxu0
    %v627 = vadd.f32 %v423, %v626
    %628 = vmatprep.mubr.bf16.mxu0 0
    %629 = vmatmul.mubr.bf16.gmra.mrb[0].mxu0 %v391
    %v630 = vpop.f32.mrb[0].mxu0
    %v631 = vadd.f32 %v419, %v630
    %v632 = vpop.f32.mrb[0].mxu0
    %v633 = vadd.f32 %v423, %v632
    %v634 = vpop.f32.mrb[0].mxu0
    %v635 = vadd.f32 %v419, %v634
    %v636 = vpop.f32.mrb[0].mxu0
    %v637 = vadd.f32 %v423, %v636
    %638 = vmatprep.mubr.bf16.mxu0 0
    %639 = vmatmul.mubr.bf16.gmra.mrb[0].mxu0 %v392
    %v640 = vpop.f32.mrb[0].mxu0
    %v641 = vadd.f32 %v419, %v640
    %v642 = vpop.f32.mrb[0].mxu0
    %v643 = vadd.f32 %v423, %v642
    %v644 = vpop.f32.mrb[0].mxu0
    %v645 = vadd.f32 %v419, %v644
    %v646 = vpop.f32.mrb[0].mxu0
    %v647 = vadd.f32 %v423, %v646
    %648 = vmatprep.mubr.bf16.mxu0 0
    %649 = vmatmul.mubr.bf16.gmra.mrb[0].mxu0 %v393
    %v650 = vpop.f32.mrb[0].mxu0
    %v651 = vadd.f32 %v419, %v650
    %v652 = vpop.f32.mrb[0].mxu0
    %v653 = vadd.f32 %v423, %v652
    %v654 = vpop.f32.mrb[0].mxu0
    %v655 = vadd.f32 %v419, %v654
    %v656 = vpop.f32.mrb[0].mxu0
    %v657 = vadd.f32 %v423, %v656
    %658 = vmatprep.mubr.bf16.mxu0 0
    %659 = vmatmul.mubr.bf16.gmra.mrb[0].mxu0 %v394
    %v660 = vpop.f32.mrb[0].mxu0
    %v661 = vadd.f32 %v419, %v660
    %v662 = vpop.f32.mrb[0].mxu0
    %v663 = vadd.f32 %v423, %v662
    %v664 = vpop.f32.mrb[0].mxu0
    %v665 = vadd.f32 %v419, %v664
    %v666 = vpop.f32.mrb[0].mxu0
    %v667 = vadd.f32 %v423, %v666
    %668 = vmatprep.mubr.bf16.mxu0 0
    %669 = vmatmul.mubr.bf16.gmra.mrb[0].mxu0 %v395
    %v670 = vpop.f32.mrb[0].mxu0
    %v671 = vadd.f32 %v419, %v670
    %v672 = vpop.f32.mrb[0].mxu0
    %v673 = vadd.f32 %v423, %v672
    %v674 = vpop.f32.mrb[0].mxu0
    %v675 = vadd.f32 %v419, %v674
    %v676 = vpop.f32.mrb[0].mxu0
    %v677 = vadd.f32 %v423, %v676
    %678 = vmatprep.mubr.bf16.mxu0 0
    %679 = vmatmul.mubr.bf16.gmra.mrb[0].mxu0 %v396
    %v680 = vpop.f32.mrb[0].mxu0
    %v681 = vadd.f32 %v419, %v680
    %v682 = vpop.f32.mrb[0].mxu0
    %v683 = vadd.f32 %v423, %v682
    %v684 = vpop.f32.mrb[0].mxu0
    %v685 = vadd.f32 %v419, %v684
    %v686 = vpop.f32.mrb[0].mxu0
    %v687 = vadd.f32 %v423, %v686
    %688 = vmatprep.mubr.bf16.mxu0 0
    %689 = vmatmul.mubr.bf16.gmra.mrb[0].mxu0 %v397
    %v690 = vpop.f32.mrb[0].mxu0
    %v691 = vadd.f32 %v419, %v690
    %v692 = vpop.f32.mrb[0].mxu0
    %v693 = vadd.f32 %v423, %v692
    %v694 = vpop.f32.mrb[0].mxu0
    %v695 = vadd.f32 %v419, %v694
    %v696 = vpop.f32.mrb[0].mxu0
    %v697 = vadd.f32 %v423, %v696
    %698 = vdwg.mxu0
    %v699 = vxor.u32 %v541, 2147483648
    %v700 = vxor.u32 %v543, 2147483648
    %v701 = vxor.u32 %v545, 2147483648
    %v702 = vxor.u32 %v547, 2147483648
    %v703 = vxor.u32 %v551, 2147483648
    %v704 = vxor.u32 %v553, 2147483648
    %v705 = vxor.u32 %v555, 2147483648
    %v706 = vxor.u32 %v557, 2147483648
    %v707 = vxor.u32 %v561, 2147483648
    %v708 = vxor.u32 %v563, 2147483648
    %v709 = vxor.u32 %v565, 2147483648
    %v710 = vxor.u32 %v567, 2147483648
    %v711 = vxor.u32 %v571, 2147483648
    %v712 = vxor.u32 %v573, 2147483648
    %v713 = vxor.u32 %v575, 2147483648
    %v714 = vxor.u32 %v577, 2147483648
    %v715 = vxor.u32 %v581, 2147483648
    %v716 = vxor.u32 %v583, 2147483648
    %v717 = vxor.u32 %v585, 2147483648
    %v718 = vxor.u32 %v587, 2147483648
    %v719 = vxor.u32 %v591, 2147483648
    %v720 = vxor.u32 %v593, 2147483648
    %v721 = vxor.u32 %v595, 2147483648
    %v722 = vxor.u32 %v597, 2147483648
    %v723 = vxor.u32 %v601, 2147483648
    %v724 = vxor.u32 %v603, 2147483648
    %v725 = vxor.u32 %v605, 2147483648
    %v726 = vxor.u32 %v607, 2147483648
    %v727 = vxor.u32 %v611, 2147483648
    %v728 = vxor.u32 %v613, 2147483648
    %v729 = vxor.u32 %v615, 2147483648
    %v730 = vxor.u32 %v617, 2147483648
    %v731 = vxor.u32 %v621, 2147483648
    %v732 = vxor.u32 %v623, 2147483648
    %v733 = vxor.u32 %v625, 2147483648
    %v734 = vxor.u32 %v627, 2147483648
    %v735 = vxor.u32 %v631, 2147483648
    %v736 = vxor.u32 %v633, 2147483648
    %v737 = vxor.u32 %v635, 2147483648
    %v738 = vxor.u32 %v637, 2147483648
    %v739 = vxor.u32 %v641, 2147483648
    %v740 = vxor.u32 %v643, 2147483648
    %v741 = vxor.u32 %v645, 2147483648
    %v742 = vxor.u32 %v647, 2147483648
    %v743 = vxor.u32 %v651, 2147483648
    %v744 = vxor.u32 %v653, 2147483648
    %v745 = vxor.u32 %v655, 2147483648
    %v746 = vxor.u32 %v657, 2147483648
    %v747 = vxor.u32 %v661, 2147483648
    %v748 = vxor.u32 %v663, 2147483648
    %v749 = vxor.u32 %v665, 2147483648
    %v750 = vxor.u32 %v667, 2147483648
    %v751 = vxor.u32 %v671, 2147483648
    %v752 = vxor.u32 %v673, 2147483648
    %v753 = vxor.u32 %v675, 2147483648
    %v754 = vxor.u32 %v677, 2147483648
    %v755 = vxor.u32 %v681, 2147483648
    %v756 = vxor.u32 %v683, 2147483648
    %v757 = vxor.u32 %v685, 2147483648
    %v758 = vxor.u32 %v687, 2147483648
    %v759 = vxor.u32 %v691, 2147483648
    %v760 = vxor.u32 %v693, 2147483648
    %v761 = vxor.u32 %v695, 2147483648
    %v762 = vxor.u32 %v697, 2147483648
    %v763 = vmul.f32 %v699, 1.442695
    %v764 = vpow.pop %v763
    %v765 = vmul.f32 %v700, 1.442695
    %v766 = vpow.pop %v765
    %v767 = vmul.f32 %v701, 1.442695
    %v768 = vpow.pop %v767
    %v769 = vmul.f32 %v702, 1.442695
    %v770 = vpow.pop %v769
    %v771 = vmul.f32 %v703, 1.442695
    %v772 = vpow.pop %v771
    %v773 = vmul.f32 %v704, 1.442695
    %v774 = vpow.pop %v773
    %v775 = vmul.f32 %v705, 1.442695
    %v776 = vpow.pop %v775
    %v777 = vmul.f32 %v706, 1.442695
    %v778 = vpow.pop %v777
    %v779 = vmul.f32 %v707, 1.442695
    %v780 = vpow.pop %v779
    %v781 = vmul.f32 %v708, 1.442695
    %v782 = vpow.pop %v781
    %v783 = vmul.f32 %v709, 1.442695
    %v784 = vpow.pop %v783
    %v785 = vmul.f32 %v710, 1.442695
    %v786 = vpow.pop %v785
    %v787 = vmul.f32 %v711, 1.442695
    %v788 = vpow.pop %v787
    %v789 = vmul.f32 %v712, 1.442695
    %v790 = vpow.pop %v789
    %v791 = vmul.f32 %v713, 1.442695
    %v792 = vpow.pop %v791
    %v793 = vmul.f32 %v714, 1.442695
    %v794 = vpow.pop %v793
    %v795 = vmul.f32 %v715, 1.442695
    %v796 = vpow.pop %v795
    %v797 = vmul.f32 %v716, 1.442695
    %v798 = vpow.pop %v797
    %v799 = vmul.f32 %v717, 1.442695
    %v800 = vpow.pop %v799
    %v801 = vmul.f32 %v718, 1.442695
    %v802 = vpow.pop %v801
    %v803 = vmul.f32 %v719, 1.442695
    %v804 = vpow.pop %v803
    %v805 = vmul.f32 %v720, 1.442695
    %v806 = vpow.pop %v805
    %v807 = vmul.f32 %v721, 1.442695
    %v808 = vpow.pop %v807
    %v809 = vmul.f32 %v722, 1.442695
    %v810 = vpow.pop %v809
    %v811 = vmul.f32 %v723, 1.442695
    %v812 = vpow.pop %v811
    %v813 = vmul.f32 %v724, 1.442695
    %v814 = vpow.pop %v813
    %v815 = vmul.f32 %v725, 1.442695
    %v816 = vpow.pop %v815
    %v817 = vmul.f32 %v726, 1.442695
    %v818 = vpow.pop %v817
    %v819 = vmul.f32 %v727, 1.442695
    %v820 = vpow.pop %v819
    %v821 = vmul.f32 %v728, 1.442695
    %v822 = vpow.pop %v821
    %v823 = vmul.f32 %v729, 1.442695
    %v824 = vpow.pop %v823
    %v825 = vmul.f32 %v730, 1.442695
    %v826 = vpow.pop %v825
    %v827 = vmul.f32 %v731, 1.442695
    %v828 = vpow.pop %v827
    %v829 = vmul.f32 %v732, 1.442695
    %v830 = vpow.pop %v829
    %v831 = vmul.f32 %v733, 1.442695
    %v832 = vpow.pop %v831
    %v833 = vmul.f32 %v734, 1.442695
    %v834 = vpow.pop %v833
    %v835 = vmul.f32 %v735, 1.442695
    %v836 = vpow.pop %v835
    %v837 = vmul.f32 %v736, 1.442695
    %v838 = vpow.pop %v837
    %v839 = vmul.f32 %v737, 1.442695
    %v840 = vpow.pop %v839
    %v841 = vmul.f32 %v738, 1.442695
    %v842 = vpow.pop %v841
    %v843 = vmul.f32 %v739, 1.442695
    %v844 = vpow.pop %v843
    %v845 = vmul.f32 %v740, 1.442695
    %v846 = vpow.pop %v845
    %v847 = vmul.f32 %v741, 1.442695
    %v848 = vpow.pop %v847
    %v849 = vmul.f32 %v742, 1.442695
    %v850 = vpow.pop %v849
    %v851 = vmul.f32 %v743, 1.442695
    %v852 = vpow.pop %v851
    %v853 = vmul.f32 %v744, 1.442695
    %v854 = vpow.pop %v853
    %v855 = vmul.f32 %v745, 1.442695
    %v856 = vpow.pop %v855
    %v857 = vmul.f32 %v746, 1.442695
    %v858 = vpow.pop %v857
    %v859 = vmul.f32 %v747, 1.442695
    %v860 = vpow.pop %v859
    %v861 = vmul.f32 %v748, 1.442695
    %v862 = vpow.pop %v861
    %v863 = vmul.f32 %v749, 1.442695
    %v864 = vpow.pop %v863
    %v865 = vmul.f32 %v750, 1.442695
    %v866 = vpow.pop %v865
    %v867 = vmul.f32 %v751, 1.442695
    %v868 = vpow.pop %v867
    %v869 = vmul.f32 %v752, 1.442695
    %v870 = vpow.pop %v869
    %v871 = vmul.f32 %v753, 1.442695
    %v872 = vpow.pop %v871
    %v873 = vmul.f32 %v754, 1.442695
    %v874 = vpow.pop %v873
    %v875 = vmul.f32 %v755, 1.442695
    %v876 = vpow.pop %v875
    %v877 = vmul.f32 %v756, 1.442695
    %v878 = vpow.pop %v877
    %v879 = vmul.f32 %v757, 1.442695
    %v880 = vpow.pop %v879
    %v881 = vmul.f32 %v758, 1.442695
    %v882 = vpow.pop %v881
    %v883 = vmul.f32 %v759, 1.442695
    %v884 = vpow.pop %v883
    %v885 = vmul.f32 %v760, 1.442695
    %v886 = vpow.pop %v885
    %v887 = vmul.f32 %v761, 1.442695
    %v888 = vpow.pop %v887
    %v889 = vmul.f32 %v762, 1.442695
    %v890 = vpow.pop %v889
    %v891 = vadd.f32 %v764, 1.0
    %v892 = vadd.f32 %v766, 1.0
    %v893 = vadd.f32 %v768, 1.0
    %v894 = vadd.f32 %v770, 1.0
    %v895 = vadd.f32 %v772, 1.0
    %v896 = vadd.f32 %v774, 1.0
    %v897 = vadd.f32 %v776, 1.0
    %v898 = vadd.f32 %v778, 1.0
    %v899 = vadd.f32 %v780, 1.0
    %v900 = vadd.f32 %v782, 1.0
    %v901 = vadd.f32 %v784, 1.0
    %v902 = vadd.f32 %v786, 1.0
    %v903 = vadd.f32 %v788, 1.0
    %v904 = vadd.f32 %v790, 1.0
    %v905 = vadd.f32 %v792, 1.0
    %v906 = vadd.f32 %v794, 1.0
    %v907 = vadd.f32 %v796, 1.0
    %v908 = vadd.f32 %v798, 1.0
    %v909 = vadd.f32 %v800, 1.0
    %v910 = vadd.f32 %v802, 1.0
    %v911 = vadd.f32 %v804, 1.0
    %v912 = vadd.f32 %v806, 1.0
    %v913 = vadd.f32 %v808, 1.0
    %v914 = vadd.f32 %v810, 1.0
    %v915 = vadd.f32 %v812, 1.0
    %v916 = vadd.f32 %v814, 1.0
    %v917 = vadd.f32 %v816, 1.0
    %v918 = vadd.f32 %v818, 1.0
    %v919 = vadd.f32 %v820, 1.0
    %v920 = vadd.f32 %v822, 1.0
    %v921 = vadd.f32 %v824, 1.0
    %v922 = vadd.f32 %v826, 1.0
    %v923 = vadd.f32 %v828, 1.0
    %v924 = vadd.f32 %v830, 1.0
    %v925 = vadd.f32 %v832, 1.0
    %v926 = vadd.f32 %v834, 1.0
    %v927 = vadd.f32 %v836, 1.0
    %v928 = vadd.f32 %v838, 1.0
    %v929 = vadd.f32 %v840, 1.0
    %v930 = vadd.f32 %v842, 1.0
    %v931 = vadd.f32 %v844, 1.0
    %v932 = vadd.f32 %v846, 1.0
    %v933 = vadd.f32 %v848, 1.0
    %v934 = vadd.f32 %v850, 1.0
    %v935 = vadd.f32 %v852, 1.0
    %v936 = vadd.f32 %v854, 1.0
    %v937 = vadd.f32 %v856, 1.0
    %v938 = vadd.f32 %v858, 1.0
    %v939 = vadd.f32 %v860, 1.0
    %v940 = vadd.f32 %v862, 1.0
    %v941 = vadd.f32 %v864, 1.0
    %v942 = vadd.f32 %v866, 1.0
    %v943 = vadd.f32 %v868, 1.0
    %v944 = vadd.f32 %v870, 1.0
    %v945 = vadd.f32 %v872, 1.0
    %v946 = vadd.f32 %v874, 1.0
    %v947 = vadd.f32 %v876, 1.0
    %v948 = vadd.f32 %v878, 1.0
    %v949 = vadd.f32 %v880, 1.0
    %v950 = vadd.f32 %v882, 1.0
    %v951 = vadd.f32 %v884, 1.0
    %v952 = vadd.f32 %v886, 1.0
    %v953 = vadd.f32 %v888, 1.0
    %v954 = vadd.f32 %v890, 1.0
    %v955 = vrcp.pop %v891
    %v956 = vmul.f32 1.0, %v955
    %v957 = vrcp.pop %v892
    %v958 = vmul.f32 1.0, %v957
    %v959 = vrcp.pop %v893
    %v960 = vmul.f32 1.0, %v959
    %v961 = vrcp.pop %v894
    %v962 = vmul.f32 1.0, %v961
    %v963 = vrcp.pop %v895
    %v964 = vmul.f32 1.0, %v963
    %v965 = vrcp.pop %v896
    %v966 = vmul.f32 1.0, %v965
    %v967 = vrcp.pop %v897
    %v968 = vmul.f32 1.0, %v967
    %v969 = vrcp.pop %v898
    %v970 = vmul.f32 1.0, %v969
    %v971 = vrcp.pop %v899
    %v972 = vmul.f32 1.0, %v971
    %v973 = vrcp.pop %v900
    %v974 = vmul.f32 1.0, %v973
    %v975 = vrcp.pop %v901
    %v976 = vmul.f32 1.0, %v975
    %v977 = vrcp.pop %v902
    %v978 = vmul.f32 1.0, %v977
    %v979 = vrcp.pop %v903
    %v980 = vmul.f32 1.0, %v979
    %v981 = vrcp.pop %v904
    %v982 = vmul.f32 1.0, %v981
    %v983 = vrcp.pop %v905
    %v984 = vmul.f32 1.0, %v983
    %v985 = vrcp.pop %v906
    %v986 = vmul.f32 1.0, %v985
    %v987 = vrcp.pop %v907
    %v988 = vmul.f32 1.0, %v987
    %v989 = vrcp.pop %v908
    %v990 = vmul.f32 1.0, %v989
    %v991 = vrcp.pop %v909
    %v992 = vmul.f32 1.0, %v991
    %v993 = vrcp.pop %v910
    %v994 = vmul.f32 1.0, %v993
    %v995 = vrcp.pop %v911
    %v996 = vmul.f32 1.0, %v995
    %v997 = vrcp.pop %v912
    %v998 = vmul.f32 1.0, %v997
    %v999 = vrcp.pop %v913
    %v1000 = vmul.f32 1.0, %v999
    %v1001 = vrcp.pop %v914
    %v1002 = vmul.f32 1.0, %v1001
    %v1003 = vrcp.pop %v915
    %v1004 = vmul.f32 1.0, %v1003
    %v1005 = vrcp.pop %v916
    %v1006 = vmul.f32 1.0, %v1005
    %v1007 = vrcp.pop %v917
    %v1008 = vmul.f32 1.0, %v1007
    %v1009 = vrcp.pop %v918
    %v1010 = vmul.f32 1.0, %v1009
    %v1011 = vrcp.pop %v919
    %v1012 = vmul.f32 1.0, %v1011
    %v1013 = vrcp.pop %v920
    %v1014 = vmul.f32 1.0, %v1013
    %v1015 = vrcp.pop %v921
    %v1016 = vmul.f32 1.0, %v1015
    %v1017 = vrcp.pop %v922
    %v1018 = vmul.f32 1.0, %v1017
    %v1019 = vrcp.pop %v923
    %v1020 = vmul.f32 1.0, %v1019
    %v1021 = vrcp.pop %v924
    %v1022 = vmul.f32 1.0, %v1021
    %v1023 = vrcp.pop %v925
    %v1024 = vmul.f32 1.0, %v1023
    %v1025 = vrcp.pop %v926
    %v1026 = vmul.f32 1.0, %v1025
    %v1027 = vrcp.pop %v927
    %v1028 = vmul.f32 1.0, %v1027
    %v1029 = vrcp.pop %v928
    %v1030 = vmul.f32 1.0, %v1029
    %v1031 = vrcp.pop %v929
    %v1032 = vmul.f32 1.0, %v1031
    %v1033 = vrcp.pop %v930
    %v1034 = vmul.f32 1.0, %v1033
    %v1035 = vrcp.pop %v931
    %v1036 = vmul.f32 1.0, %v1035
    %v1037 = vrcp.pop %v932
    %v1038 = vmul.f32 1.0, %v1037
    %v1039 = vrcp.pop %v933
    %v1040 = vmul.f32 1.0, %v1039
    %v1041 = vrcp.pop %v934
    %v1042 = vmul.f32 1.0, %v1041
    %v1043 = vrcp.pop %v935
    %v1044 = vmul.f32 1.0, %v1043
    %v1045 = vrcp.pop %v936
    %v1046 = vmul.f32 1.0, %v1045
    %v1047 = vrcp.pop %v937
    %v1048 = vmul.f32 1.0, %v1047
    %v1049 = vrcp.pop %v938
    %v1050 = vmul.f32 1.0, %v1049
    %v1051 = vrcp.pop %v939
    %v1052 = vmul.f32 1.0, %v1051
    %v1053 = vrcp.pop %v940
    %v1054 = vmul.f32 1.0, %v1053
    %v1055 = vrcp.pop %v941
    %v1056 = vmul.f32 1.0, %v1055
    %v1057 = vrcp.pop %v942
    %v1058 = vmul.f32 1.0, %v1057
    %v1059 = vrcp.pop %v943
    %v1060 = vmul.f32 1.0, %v1059
    %v1061 = vrcp.pop %v944
    %v1062 = vmul.f32 1.0, %v1061
    %v1063 = vrcp.pop %v945
    %v1064 = vmul.f32 1.0, %v1063
    %v1065 = vrcp.pop %v946
    %v1066 = vmul.f32 1.0, %v1065
    %v1067 = vrcp.pop %v947
    %v1068 = vmul.f32 1.0, %v1067
    %v1069 = vrcp.pop %v948
    %v1070 = vmul.f32 1.0, %v1069
    %v1071 = vrcp.pop %v949
    %v1072 = vmul.f32 1.0, %v1071
    %v1073 = vrcp.pop %v950
    %v1074 = vmul.f32 1.0, %v1073
    %v1075 = vrcp.pop %v951
    %v1076 = vmul.f32 1.0, %v1075
    %v1077 = vrcp.pop %v952
    %v1078 = vmul.f32 1.0, %v1077
    %v1079 = vrcp.pop %v953
    %v1080 = vmul.f32 1.0, %v1079
    %v1081 = vrcp.pop %v954
    %v1082 = vmul.f32 1.0, %v1081
    %v1083 = vld [vmem:[#allocation7] sm:$0xff]
    %v1084 = vld [vmem:[#allocation7 + $0x8] sm:$0xff]
    %v1085 = vld [vmem:[#allocation7 + $0x10] sm:$0xff]
    %v1086 = vld [vmem:[#allocation7 + $0x18] sm:$0xff]
    %v1087 = vld [vmem:[#allocation7 + $0x20] sm:$0xff]
    %v1088 = vld [vmem:[#allocation7 + $0x28] sm:$0xff]
    %v1089 = vld [vmem:[#allocation7 + $0x30] sm:$0xff]
    %v1090 = vld [vmem:[#allocation7 + $0x38] sm:$0xff]
    %v1091 = vld [vmem:[#allocation7 + $0x40] sm:$0xff]
    %v1092 = vld [vmem:[#allocation7 + $0x48] sm:$0xff]
    %v1093 = vld [vmem:[#allocation7 + $0x50] sm:$0xff]
    %v1094 = vld [vmem:[#allocation7 + $0x58] sm:$0xff]
    %v1095 = vld [vmem:[#allocation7 + $0x60] sm:$0xff]
    %v1096 = vld [vmem:[#allocation7 + $0x68] sm:$0xff]
    %v1097 = vld [vmem:[#allocation7 + $0x70] sm:$0xff]
    %v1098 = vld [vmem:[#allocation7 + $0x78] sm:$0xff]
    %v1099 = vld [vmem:[%s5] sm:$0x3]
    %v1101 = vlaneseq
    %v1102 = vshrl.u32 %v1101, 7
    %v1103 = vsub.s32 0, %v1102
    %v1104 = vrot.slane %v1099, %v1103
    %v1105 = vlaneseq
    %v1106 = vshrl.u32 %v1105, 7
    %v1107 = vsub.s32 1, %v1106
    %v1108 = vrot.slane %v1099, %v1107
    %v1127 = vunpack.c.l.b16 %v1083
    %v1128 = vunpack.c.h.b16 %v1083
    %v1129 = vunpack.c.l.b16 %v1084
    %v1130 = vunpack.c.h.b16 %v1084
    %v1131 = vunpack.c.l.b16 %v1085
    %v1132 = vunpack.c.h.b16 %v1085
    %v1133 = vunpack.c.l.b16 %v1086
    %v1134 = vunpack.c.h.b16 %v1086
    %v1135 = vunpack.c.l.b16 %v1087
    %v1136 = vunpack.c.h.b16 %v1087
    %v1137 = vunpack.c.l.b16 %v1088
    %v1138 = vunpack.c.h.b16 %v1088
    %v1139 = vunpack.c.l.b16 %v1089
    %v1140 = vunpack.c.h.b16 %v1089
    %v1141 = vunpack.c.l.b16 %v1090
    %v1142 = vunpack.c.h.b16 %v1090
    %v1143 = vunpack.c.l.b16 %v1091
    %v1144 = vunpack.c.h.b16 %v1091
    %v1145 = vunpack.c.l.b16 %v1092
    %v1146 = vunpack.c.h.b16 %v1092
    %v1147 = vunpack.c.l.b16 %v1093
    %v1148 = vunpack.c.h.b16 %v1093
    %v1149 = vunpack.c.l.b16 %v1094
    %v1150 = vunpack.c.h.b16 %v1094
    %v1151 = vunpack.c.l.b16 %v1095
    %v1152 = vunpack.c.h.b16 %v1095
    %v1153 = vunpack.c.l.b16 %v1096
    %v1154 = vunpack.c.h.b16 %v1096
    %v1155 = vunpack.c.l.b16 %v1097
    %v1156 = vunpack.c.h.b16 %v1097
    %v1157 = vunpack.c.l.b16 %v1098
    %v1158 = vunpack.c.h.b16 %v1098
    %v1159 = vpack.c.b16 %v1129, %v1127
    %v1160 = vpack.c.b16 %v1130, %v1128
    %v1161 = vpack.c.b16 %v1133, %v1131
    %v1162 = vpack.c.b16 %v1134, %v1132
    %v1163 = vpack.c.b16 %v1137, %v1135
    %v1164 = vpack.c.b16 %v1138, %v1136
    %v1165 = vpack.c.b16 %v1141, %v1139
    %v1166 = vpack.c.b16 %v1142, %v1140
    %v1167 = vpack.c.b16 %v1145, %v1143
    %v1168 = vpack.c.b16 %v1146, %v1144
    %v1169 = vpack.c.b16 %v1149, %v1147
    %v1170 = vpack.c.b16 %v1150, %v1148
    %v1171 = vpack.c.b16 %v1153, %v1151
    %v1172 = vpack.c.b16 %v1154, %v1152
    %v1173 = vpack.c.b16 %v1157, %v1155
    %v1174 = vpack.c.b16 %v1158, %v1156
    %1191 = vmatprep.subr.bf16.mxu0 %v1160
    %1192 = vmatpush1.bf16.msra.mxu0 %v1159
    %1193 = vmatprep.subr.bf16.mxu0 %v1162
    %1194 = vmatpush1.bf16.msra.mxu0 %v1161
    %1195 = vmatprep.subr.bf16.mxu0 %v1164
    %1196 = vmatpush1.bf16.msra.mxu0 %v1163
    %1197 = vmatprep.subr.bf16.mxu0 %v1166
    %1198 = vmatpush1.bf16.msra.mxu0 %v1165
    %1199 = vmatprep.subr.bf16.mxu0 %v1168
    %1200 = vmatpush1.bf16.msra.mxu0 %v1167
    %1201 = vmatprep.subr.bf16.mxu0 %v1170
    %1202 = vmatpush1.bf16.msra.mxu0 %v1169
    %1203 = vmatprep.subr.bf16.mxu0 %v1172
    %1204 = vmatpush1.bf16.msra.mxu0 %v1171
    %1205 = vmatprep.subr.bf16.mxu0 %v1174
    %1206 = vmatpush1.bf16.msra.mxu0 %v1173
    %1207 = vmatprep.subr.bf16.mxu0 0
    %1208 = vmatpush1.bf16.msra.mxu0 0
    %1209 = vmatprep.subr.bf16.mxu0 0
    %1210 = vmatpush1.bf16.msra.mxu0 0
    %1211 = vmatprep.subr.bf16.mxu0 0
    %1212 = vmatpush1.bf16.msra.mxu0 0
    %1213 = vmatprep.subr.bf16.mxu0 0
    %1214 = vmatpush1.bf16.msra.mxu0 0
    %1215 = vmatprep.subr.bf16.mxu0 0
    %1216 = vmatpush1.bf16.msra.mxu0 0
    %1217 = vmatprep.subr.bf16.mxu0 0
    %1218 = vmatpush1.bf16.msra.mxu0 0
    %1219 = vmatprep.subr.bf16.mxu0 0
    %1220 = vmatpush1.bf16.msra.mxu0 0
    %1221 = vmatprep.subr.bf16.mxu0 0
    %1222 = vmatpush1.bf16.msra.mxu0 0
    %1223 = vmatprep.mubr.bf16.mxu0 0
    %1224 = vmatmul.mubr.bf16.gmra.mrb[0].mxu0 %v382
    %v1225 = vpop.f32.mrb[0].mxu0
    %v1226 = vadd.f32 %v1104, %v1225
    %v1227 = vpop.f32.mrb[0].mxu0
    %v1228 = vadd.f32 %v1108, %v1227
    %v1229 = vpop.f32.mrb[0].mxu0
    %v1230 = vadd.f32 %v1104, %v1229
    %v1231 = vpop.f32.mrb[0].mxu0
    %v1232 = vadd.f32 %v1108, %v1231
    %1233 = vmatprep.mubr.bf16.mxu0 0
    %1234 = vmatmul.mubr.bf16.gmra.mrb[0].mxu0 %v383
    %v1235 = vpop.f32.mrb[0].mxu0
    %v1236 = vadd.f32 %v1104, %v1235
    %v1237 = vpop.f32.mrb[0].mxu0
    %v1238 = vadd.f32 %v1108, %v1237
    %v1239 = vpop.f32.mrb[0].mxu0
    %v1240 = vadd.f32 %v1104, %v1239
    %v1241 = vpop.f32.mrb[0].mxu0
    %v1242 = vadd.f32 %v1108, %v1241
    %1243 = vmatprep.mubr.bf16.mxu0 0
    %1244 = vmatmul.mubr.bf16.gmra.mrb[0].mxu0 %v384
    %v1245 = vpop.f32.mrb[0].mxu0
    %v1246 = vadd.f32 %v1104, %v1245
    %v1247 = vpop.f32.mrb[0].mxu0
    %v1248 = vadd.f32 %v1108, %v1247
    %v1249 = vpop.f32.mrb[0].mxu0
    %v1250 = vadd.f32 %v1104, %v1249
    %v1251 = vpop.f32.mrb[0].mxu0
    %v1252 = vadd.f32 %v1108, %v1251
    %1253 = vmatprep.mubr.bf16.mxu0 0
    %1254 = vmatmul.mubr.bf16.gmra.mrb[0].mxu0 %v385
    %v1255 = vpop.f32.mrb[0].mxu0
    %v1256 = vadd.f32 %v1104, %v1255
    %v1257 = vpop.f32.mrb[0].mxu0
    %v1258 = vadd.f32 %v1108, %v1257
    %v1259 = vpop.f32.mrb[0].mxu0
    %v1260 = vadd.f32 %v1104, %v1259
    %v1261 = vpop.f32.mrb[0].mxu0
    %v1262 = vadd.f32 %v1108, %v1261
    %1263 = vmatprep.mubr.bf16.mxu0 0
    %1264 = vmatmul.mubr.bf16.gmra.mrb[0].mxu0 %v386
    %v1265 = vpop.f32.mrb[0].mxu0
    %v1266 = vadd.f32 %v1104, %v1265
    %v1267 = vpop.f32.mrb[0].mxu0
    %v1268 = vadd.f32 %v1108, %v1267
    %v1269 = vpop.f32.mrb[0].mxu0
    %v1270 = vadd.f32 %v1104, %v1269
    %v1271 = vpop.f32.mrb[0].mxu0
    %v1272 = vadd.f32 %v1108, %v1271
    %1273 = vmatprep.mubr.bf16.mxu0 0
    %1274 = vmatmul.mubr.bf16.gmra.mrb[0].mxu0 %v387
    %v1275 = vpop.f32.mrb[0].mxu0
    %v1276 = vadd.f32 %v1104, %v1275
    %v1277 = vpop.f32.mrb[0].mxu0
    %v1278 = vadd.f32 %v1108, %v1277
    %v1279 = vpop.f32.mrb[0].mxu0
    %v1280 = vadd.f32 %v1104, %v1279
    %v1281 = vpop.f32.mrb[0].mxu0
    %v1282 = vadd.f32 %v1108, %v1281
    %1283 = vmatprep.mubr.bf16.mxu0 0
    %1284 = vmatmul.mubr.bf16.gmra.mrb[0].mxu0 %v388
    %v1285 = vpop.f32.mrb[0].mxu0
    %v1286 = vadd.f32 %v1104, %v1285
    %v1287 = vpop.f32.mrb[0].mxu0
    %v1288 = vadd.f32 %v1108, %v1287
    %v1289 = vpop.f32.mrb[0].mxu0
    %v1290 = vadd.f32 %v1104, %v1289
    %v1291 = vpop.f32.mrb[0].mxu0
    %v1292 = vadd.f32 %v1108, %v1291
    %1293 = vmatprep.mubr.bf16.mxu0 0
    %1294 = vmatmul.mubr.bf16.gmra.mrb[0].mxu0 %v389
    %v1295 = vpop.f32.mrb[0].mxu0
    %v1296 = vadd.f32 %v1104, %v1295
    %v1297 = vpop.f32.mrb[0].mxu0
    %v1298 = vadd.f32 %v1108, %v1297
    %v1299 = vpop.f32.mrb[0].mxu0
    %v1300 = vadd.f32 %v1104, %v1299
    %v1301 = vpop.f32.mrb[0].mxu0
    %v1302 = vadd.f32 %v1108, %v1301
    %1303 = vmatprep.mubr.bf16.mxu0 0
    %1304 = vmatmul.mubr.bf16.gmra.mrb[0].mxu0 %v390
    %v1305 = vpop.f32.mrb[0].mxu0
    %v1306 = vadd.f32 %v1104, %v1305
    %v1307 = vpop.f32.mrb[0].mxu0
    %v1308 = vadd.f32 %v1108, %v1307
    %v1309 = vpop.f32.mrb[0].mxu0
    %v1310 = vadd.f32 %v1104, %v1309
    %v1311 = vpop.f32.mrb[0].mxu0
    %v1312 = vadd.f32 %v1108, %v1311
    %1313 = vmatprep.mubr.bf16.mxu0 0
    %1314 = vmatmul.mubr.bf16.gmra.mrb[0].mxu0 %v391
    %v1315 = vpop.f32.mrb[0].mxu0
    %v1316 = vadd.f32 %v1104, %v1315
    %v1317 = vpop.f32.mrb[0].mxu0
    %v1318 = vadd.f32 %v1108, %v1317
    %v1319 = vpop.f32.mrb[0].mxu0
    %v1320 = vadd.f32 %v1104, %v1319
    %v1321 = vpop.f32.mrb[0].mxu0
    %v1322 = vadd.f32 %v1108, %v1321
    %1323 = vmatprep.mubr.bf16.mxu0 0
    %1324 = vmatmul.mubr.bf16.gmra.mrb[0].mxu0 %v392
    %v1325 = vpop.f32.mrb[0].mxu0
    %v1326 = vadd.f32 %v1104, %v1325
    %v1327 = vpop.f32.mrb[0].mxu0
    %v1328 = vadd.f32 %v1108, %v1327
    %v1329 = vpop.f32.mrb[0].mxu0
    %v1330 = vadd.f32 %v1104, %v1329
    %v1331 = vpop.f32.mrb[0].mxu0
    %v1332 = vadd.f32 %v1108, %v1331
    %1333 = vmatprep.mubr.bf16.mxu0 0
    %1334 = vmatmul.mubr.bf16.gmra.mrb[0].mxu0 %v393
    %v1335 = vpop.f32.mrb[0].mxu0
    %v1336 = vadd.f32 %v1104, %v1335
    %v1337 = vpop.f32.mrb[0].mxu0
    %v1338 = vadd.f32 %v1108, %v1337
    %v1339 = vpop.f32.mrb[0].mxu0
    %v1340 = vadd.f32 %v1104, %v1339
    %v1341 = vpop.f32.mrb[0].mxu0
    %v1342 = vadd.f32 %v1108, %v1341
    %1343 = vmatprep.mubr.bf16.mxu0 0
    %1344 = vmatmul.mubr.bf16.gmra.mrb[0].mxu0 %v394
    %v1345 = vpop.f32.mrb[0].mxu0
    %v1346 = vadd.f32 %v1104, %v1345
    %v1347 = vpop.f32.mrb[0].mxu0
    %v1348 = vadd.f32 %v1108, %v1347
    %v1349 = vpop.f32.mrb[0].mxu0
    %v1350 = vadd.f32 %v1104, %v1349
    %v1351 = vpop.f32.mrb[0].mxu0
    %v1352 = vadd.f32 %v1108, %v1351
    %1353 = vmatprep.mubr.bf16.mxu0 0
    %1354 = vmatmul.mubr.bf16.gmra.mrb[0].mxu0 %v395
    %v1355 = vpop.f32.mrb[0].mxu0
    %v1356 = vadd.f32 %v1104, %v1355
    %v1357 = vpop.f32.mrb[0].mxu0
    %v1358 = vadd.f32 %v1108, %v1357
    %v1359 = vpop.f32.mrb[0].mxu0
    %v1360 = vadd.f32 %v1104, %v1359
    %v1361 = vpop.f32.mrb[0].mxu0
    %v1362 = vadd.f32 %v1108, %v1361
    %1363 = vmatprep.mubr.bf16.mxu0 0
    %1364 = vmatmul.mubr.bf16.gmra.mrb[0].mxu0 %v396
    %v1365 = vpop.f32.mrb[0].mxu0
    %v1366 = vadd.f32 %v1104, %v1365
    %v1367 = vpop.f32.mrb[0].mxu0
    %v1368 = vadd.f32 %v1108, %v1367
    %v1369 = vpop.f32.mrb[0].mxu0
    %v1370 = vadd.f32 %v1104, %v1369
    %v1371 = vpop.f32.mrb[0].mxu0
    %v1372 = vadd.f32 %v1108, %v1371
    %1373 = vmatprep.mubr.bf16.mxu0 0
    %1374 = vmatmul.mubr.bf16.gmra.mrb[0].mxu0 %v397
    %v1375 = vpop.f32.mrb[0].mxu0
    %v1376 = vadd.f32 %v1104, %v1375
    %v1377 = vpop.f32.mrb[0].mxu0
    %v1378 = vadd.f32 %v1108, %v1377
    %v1379 = vpop.f32.mrb[0].mxu0
    %v1380 = vadd.f32 %v1104, %v1379
    %v1381 = vpop.f32.mrb[0].mxu0
    %v1382 = vadd.f32 %v1108, %v1381
    %1383 = vdwg.mxu0
    %v1384 = vmul.f32 %v541, %v956
    %v1385 = vmul.f32 %v543, %v958
    %v1386 = vmul.f32 %v545, %v960
    %v1387 = vmul.f32 %v547, %v962
    %v1388 = vmul.f32 %v551, %v964
    %v1389 = vmul.f32 %v553, %v966
    %v1390 = vmul.f32 %v555, %v968
    %v1391 = vmul.f32 %v557, %v970
    %v1392 = vmul.f32 %v561, %v972
    %v1393 = vmul.f32 %v563, %v974
    %v1394 = vmul.f32 %v565, %v976
    %v1395 = vmul.f32 %v567, %v978
    %v1396 = vmul.f32 %v571, %v980
    %v1397 = vmul.f32 %v573, %v982
    %v1398 = vmul.f32 %v575, %v984
    %v1399 = vmul.f32 %v577, %v986
    %v1400 = vmul.f32 %v581, %v988
    %v1401 = vmul.f32 %v583, %v990
    %v1402 = vmul.f32 %v585, %v992
    %v1403 = vmul.f32 %v587, %v994
    %v1404 = vmul.f32 %v591, %v996
    %v1405 = vmul.f32 %v593, %v998
    %v1406 = vmul.f32 %v595, %v1000
    %v1407 = vmul.f32 %v597, %v1002
    %v1408 = vmul.f32 %v601, %v1004
    %v1409 = vmul.f32 %v603, %v1006
    %v1410 = vmul.f32 %v605, %v1008
    %v1411 = vmul.f32 %v607, %v1010
    %v1412 = vmul.f32 %v611, %v1012
    %v1413 = vmul.f32 %v613, %v1014
    %v1414 = vmul.f32 %v615, %v1016
    %v1415 = vmul.f32 %v617, %v1018
    %v1416 = vmul.f32 %v621, %v1020
    %v1417 = vmul.f32 %v623, %v1022
    %v1418 = vmul.f32 %v625, %v1024
    %v1419 = vmul.f32 %v627, %v1026
    %v1420 = vmul.f32 %v631, %v1028
    %v1421 = vmul.f32 %v633, %v1030
    %v1422 = vmul.f32 %v635, %v1032
    %v1423 = vmul.f32 %v637, %v1034
    %v1424 = vmul.f32 %v641, %v1036
    %v1425 = vmul.f32 %v643, %v1038
    %v1426 = vmul.f32 %v645, %v1040
    %v1427 = vmul.f32 %v647, %v1042
    %v1428 = vmul.f32 %v651, %v1044
    %v1429 = vmul.f32 %v653, %v1046
    %v1430 = vmul.f32 %v655, %v1048
    %v1431 = vmul.f32 %v657, %v1050
    %v1432 = vmul.f32 %v661, %v1052
    %v1433 = vmul.f32 %v663, %v1054
    %v1434 = vmul.f32 %v665, %v1056
    %v1435 = vmul.f32 %v667, %v1058
    %v1436 = vmul.f32 %v671, %v1060
    %v1437 = vmul.f32 %v673, %v1062
    %v1438 = vmul.f32 %v675, %v1064
    %v1439 = vmul.f32 %v677, %v1066
    %v1440 = vmul.f32 %v681, %v1068
    %v1441 = vmul.f32 %v683, %v1070
    %v1442 = vmul.f32 %v685, %v1072
    %v1443 = vmul.f32 %v687, %v1074
    %v1444 = vmul.f32 %v691, %v1076
    %v1445 = vmul.f32 %v693, %v1078
    %v1446 = vmul.f32 %v695, %v1080
    %v1447 = vmul.f32 %v697, %v1082
    %v1448 = vmul.f32 %v1384, %v1226
    %v1449 = vmul.f32 %v1385, %v1228
    %v1450 = vmul.f32 %v1386, %v1230
    %v1451 = vmul.f32 %v1387, %v1232
    %v1452 = vmul.f32 %v1388, %v1236
    %v1453 = vmul.f32 %v1389, %v1238
    %v1454 = vmul.f32 %v1390, %v1240
    %v1455 = vmul.f32 %v1391, %v1242
    %v1456 = vmul.f32 %v1392, %v1246
    %v1457 = vmul.f32 %v1393, %v1248
    %v1458 = vmul.f32 %v1394, %v1250
    %v1459 = vmul.f32 %v1395, %v1252
    %v1460 = vmul.f32 %v1396, %v1256
    %v1461 = vmul.f32 %v1397, %v1258
    %v1462 = vmul.f32 %v1398, %v1260
    %v1463 = vmul.f32 %v1399, %v1262
    %v1464 = vmul.f32 %v1400, %v1266
    %v1465 = vmul.f32 %v1401, %v1268
    %v1466 = vmul.f32 %v1402, %v1270
    %v1467 = vmul.f32 %v1403, %v1272
    %v1468 = vmul.f32 %v1404, %v1276
    %v1469 = vmul.f32 %v1405, %v1278
    %v1470 = vmul.f32 %v1406, %v1280
    %v1471 = vmul.f32 %v1407, %v1282
    %v1472 = vmul.f32 %v1408, %v1286
    %v1473 = vmul.f32 %v1409, %v1288
    %v1474 = vmul.f32 %v1410, %v1290
    %v1475 = vmul.f32 %v1411, %v1292
    %v1476 = vmul.f32 %v1412, %v1296
    %v1477 = vmul.f32 %v1413, %v1298
    %v1478 = vmul.f32 %v1414, %v1300
    %v1479 = vmul.f32 %v1415, %v1302
    %v1480 = vmul.f32 %v1416, %v1306
    %v1481 = vmul.f32 %v1417, %v1308
    %v1482 = vmul.f32 %v1418, %v1310
    %v1483 = vmul.f32 %v1419, %v1312
    %v1484 = vmul.f32 %v1420, %v1316
    %v1485 = vmul.f32 %v1421, %v1318
    %v1486 = vmul.f32 %v1422, %v1320
    %v1487 = vmul.f32 %v1423, %v1322
    %v1488 = vmul.f32 %v1424, %v1326
    %v1489 = vmul.f32 %v1425, %v1328
    %v1490 = vmul.f32 %v1426, %v1330
    %v1491 = vmul.f32 %v1427, %v1332
    %v1492 = vmul.f32 %v1428, %v1336
    %v1493 = vmul.f32 %v1429, %v1338
    %v1494 = vmul.f32 %v1430, %v1340
    %v1495 = vmul.f32 %v1431, %v1342
    %v1496 = vmul.f32 %v1432, %v1346
    %v1497 = vmul.f32 %v1433, %v1348
    %v1498 = vmul.f32 %v1434, %v1350
    %v1499 = vmul.f32 %v1435, %v1352
    %v1500 = vmul.f32 %v1436, %v1356
    %v1501 = vmul.f32 %v1437, %v1358
    %v1502 = vmul.f32 %v1438, %v1360
    %v1503 = vmul.f32 %v1439, %v1362
    %v1504 = vmul.f32 %v1440, %v1366
    %v1505 = vmul.f32 %v1441, %v1368
    %v1506 = vmul.f32 %v1442, %v1370
    %v1507 = vmul.f32 %v1443, %v1372
    %v1508 = vmul.f32 %v1444, %v1376
    %v1509 = vmul.f32 %v1445, %v1378
    %v1510 = vmul.f32 %v1446, %v1380
    %v1511 = vmul.f32 %v1447, %v1382
    %v1512 = vpack.c.bf16 %v1450, %v1448
    %v1513 = vpack.c.bf16 %v1451, %v1449
    %v1514 = vpack.c.bf16 %v1454, %v1452
    %v1515 = vpack.c.bf16 %v1455, %v1453
    %v1516 = vpack.c.bf16 %v1458, %v1456
    %v1517 = vpack.c.bf16 %v1459, %v1457
    %v1518 = vpack.c.bf16 %v1462, %v1460
    %v1519 = vpack.c.bf16 %v1463, %v1461
    %v1520 = vpack.c.bf16 %v1466, %v1464
    %v1521 = vpack.c.bf16 %v1467, %v1465
    %v1522 = vpack.c.bf16 %v1470, %v1468
    %v1523 = vpack.c.bf16 %v1471, %v1469
    %v1524 = vpack.c.bf16 %v1474, %v1472
    %v1525 = vpack.c.bf16 %v1475, %v1473
    %v1526 = vpack.c.bf16 %v1478, %v1476
    %v1527 = vpack.c.bf16 %v1479, %v1477
    %v1528 = vpack.c.bf16 %v1482, %v1480
    %v1529 = vpack.c.bf16 %v1483, %v1481
    %v1530 = vpack.c.bf16 %v1486, %v1484
    %v1531 = vpack.c.bf16 %v1487, %v1485
    %v1532 = vpack.c.bf16 %v1490, %v1488
    %v1533 = vpack.c.bf16 %v1491, %v1489
    %v1534 = vpack.c.bf16 %v1494, %v1492
    %v1535 = vpack.c.bf16 %v1495, %v1493
    %v1536 = vpack.c.bf16 %v1498, %v1496
    %v1537 = vpack.c.bf16 %v1499, %v1497
    %v1538 = vpack.c.bf16 %v1502, %v1500
    %v1539 = vpack.c.bf16 %v1503, %v1501
    %v1540 = vpack.c.bf16 %v1506, %v1504
    %v1541 = vpack.c.bf16 %v1507, %v1505
    %v1542 = vpack.c.bf16 %v1510, %v1508
    %v1543 = vpack.c.bf16 %v1511, %v1509
    %v1544 = vld [vmem:[#allocation8] sm:$0xf]
    %v1545 = vld [vmem:[#allocation8 + $0x4] sm:$0xf]
    %v1546 = vld [vmem:[#allocation8 + $0x8] sm:$0xf]
    %v1547 = vld [vmem:[#allocation8 + $0xc] sm:$0xf]
    %v1548 = vld [vmem:[#allocation8 + $0x10] sm:$0xf]
    %v1549 = vld [vmem:[#allocation8 + $0x14] sm:$0xf]
    %v1550 = vld [vmem:[#allocation8 + $0x18] sm:$0xf]
    %v1551 = vld [vmem:[#allocation8 + $0x1c] sm:$0xf]
    %v1552 = vld [vmem:[#allocation8 + $0x20] sm:$0xf]
    %v1553 = vld [vmem:[#allocation8 + $0x24] sm:$0xf]
    %v1554 = vld [vmem:[#allocation8 + $0x28] sm:$0xf]
    %v1555 = vld [vmem:[#allocation8 + $0x2c] sm:$0xf]
    %v1556 = vld [vmem:[#allocation8 + $0x30] sm:$0xf]
    %v1557 = vld [vmem:[#allocation8 + $0x34] sm:$0xf]
    %v1558 = vld [vmem:[#allocation8 + $0x38] sm:$0xf]
    %v1559 = vld [vmem:[#allocation8 + $0x3c] sm:$0xf]
    %v1560 = vld [vmem:[#allocation8 + $0x40] sm:$0xf]
    %v1561 = vld [vmem:[#allocation8 + $0x44] sm:$0xf]
    %v1562 = vld [vmem:[#allocation8 + $0x48] sm:$0xf]
    %v1563 = vld [vmem:[#allocation8 + $0x4c] sm:$0xf]
    %v1564 = vld [vmem:[#allocation8 + $0x50] sm:$0xf]
    %v1565 = vld [vmem:[#allocation8 + $0x54] sm:$0xf]
    %v1566 = vld [vmem:[#allocation8 + $0x58] sm:$0xf]
    %v1567 = vld [vmem:[#allocation8 + $0x5c] sm:$0xf]
    %v1568 = vld [vmem:[#allocation8 + $0x60] sm:$0xf]
    %v1569 = vld [vmem:[#allocation8 + $0x64] sm:$0xf]
    %v1570 = vld [vmem:[#allocation8 + $0x68] sm:$0xf]
    %v1571 = vld [vmem:[#allocation8 + $0x6c] sm:$0xf]
    %v1572 = vld [vmem:[#allocation8 + $0x70] sm:$0xf]
    %v1573 = vld [vmem:[#allocation8 + $0x74] sm:$0xf]
    %v1574 = vld [vmem:[#allocation8 + $0x78] sm:$0xf]
    %v1575 = vld [vmem:[#allocation8 + $0x7c] sm:$0xf]
    %v1576 = vld [vmem:[%s7] sm:$0x1]
    %v1578 = vlaneseq
    %v1579 = vshrl.u32 %v1578, 7
    %v1580 = vsub.s32 0, %v1579
    %v1581 = vrot.slane %v1576, %v1580
    %v1615 = vunpack.c.l.b16 %v1544
    %v1616 = vunpack.c.l.b16 %v1545
    %v1617 = vunpack.c.l.b16 %v1546
    %v1618 = vunpack.c.l.b16 %v1547
    %v1619 = vunpack.c.l.b16 %v1548
    %v1620 = vunpack.c.l.b16 %v1549
    %v1621 = vunpack.c.l.b16 %v1550
    %v1622 = vunpack.c.l.b16 %v1551
    %v1623 = vunpack.c.l.b16 %v1552
    %v1624 = vunpack.c.l.b16 %v1553
    %v1625 = vunpack.c.l.b16 %v1554
    %v1626 = vunpack.c.l.b16 %v1555
    %v1627 = vunpack.c.l.b16 %v1556
    %v1628 = vunpack.c.l.b16 %v1557
    %v1629 = vunpack.c.l.b16 %v1558
    %v1630 = vunpack.c.l.b16 %v1559
    %v1631 = vunpack.c.l.b16 %v1560
    %v1632 = vunpack.c.l.b16 %v1561
    %v1633 = vunpack.c.l.b16 %v1562
    %v1634 = vunpack.c.l.b16 %v1563
    %v1635 = vunpack.c.l.b16 %v1564
    %v1636 = vunpack.c.l.b16 %v1565
    %v1637 = vunpack.c.l.b16 %v1566
    %v1638 = vunpack.c.l.b16 %v1567
    %v1639 = vunpack.c.l.b16 %v1568
    %v1640 = vunpack.c.l.b16 %v1569
    %v1641 = vunpack.c.l.b16 %v1570
    %v1642 = vunpack.c.l.b16 %v1571
    %v1643 = vunpack.c.l.b16 %v1572
    %v1644 = vunpack.c.l.b16 %v1573
    %v1645 = vunpack.c.l.b16 %v1574
    %v1646 = vunpack.c.l.b16 %v1575
    %v1647 = vpack.c.b16 %v1616, %v1615
    %v1648 = vpack.c.b16 %v1618, %v1617
    %v1649 = vpack.c.b16 %v1620, %v1619
    %v1650 = vpack.c.b16 %v1622, %v1621
    %v1651 = vpack.c.b16 %v1624, %v1623
    %v1652 = vpack.c.b16 %v1626, %v1625
    %v1653 = vpack.c.b16 %v1628, %v1627
    %v1654 = vpack.c.b16 %v1630, %v1629
    %v1655 = vpack.c.b16 %v1632, %v1631
    %v1656 = vpack.c.b16 %v1634, %v1633
    %v1657 = vpack.c.b16 %v1636, %v1635
    %v1658 = vpack.c.b16 %v1638, %v1637
    %v1659 = vpack.c.b16 %v1640, %v1639
    %v1660 = vpack.c.b16 %v1642, %v1641
    %v1661 = vpack.c.b16 %v1644, %v1643
    %v1662 = vpack.c.b16 %v1646, %v1645
    %1679 = vmatprep.subr.bf16.mxu0 0
    %1680 = vmatpush1.bf16.msra.mxu0 %v1647
    %1681 = vmatprep.subr.bf16.mxu0 0
    %1682 = vmatpush1.bf16.msra.mxu0 %v1648
    %1683 = vmatprep.subr.bf16.mxu0 0
    %1684 = vmatpush1.bf16.msra.mxu0 %v1649
    %1685 = vmatprep.subr.bf16.mxu0 0
    %1686 = vmatpush1.bf16.msra.mxu0 %v1650
    %1687 = vmatprep.subr.bf16.mxu0 0
    %1688 = vmatpush1.bf16.msra.mxu0 %v1651
    %1689 = vmatprep.subr.bf16.mxu0 0
    %1690 = vmatpush1.bf16.msra.mxu0 %v1652
    %1691 = vmatprep.subr.bf16.mxu0 0
    %1692 = vmatpush1.bf16.msra.mxu0 %v1653
    %1693 = vmatprep.subr.bf16.mxu0 0
    %1694 = vmatpush1.bf16.msra.mxu0 %v1654
    %1695 = vmatprep.subr.bf16.mxu0 0
    %1696 = vmatpush1.bf16.msra.mxu0 %v1655
    %1697 = vmatprep.subr.bf16.mxu0 0
    %1698 = vmatpush1.bf16.msra.mxu0 %v1656
    %1699 = vmatprep.subr.bf16.mxu0 0
    %1700 = vmatpush1.bf16.msra.mxu0 %v1657
    %1701 = vmatprep.subr.bf16.mxu0 0
    %1702 = vmatpush1.bf16.msra.mxu0 %v1658
    %1703 = vmatprep.subr.bf16.mxu0 0
    %1704 = vmatpush1.bf16.msra.mxu0 %v1659
    %1705 = vmatprep.subr.bf16.mxu0 0
    %1706 = vmatpush1.bf16.msra.mxu0 %v1660
    %1707 = vmatprep.subr.bf16.mxu0 0
    %1708 = vmatpush1.bf16.msra.mxu0 %v1661
    %1709 = vmatprep.subr.bf16.mxu0 0
    %1710 = vmatpush1.bf16.msra.mxu0 %v1662
    %1711 = vmatprep.mubr.bf16.mxu0 %v1513
    %1712 = vmatmul.mubr.bf16.gmra.mrb[0].mxu0 %v1512
    %v1713 = vpop.f32.mrb[0].mxu0
    %v1714 = vadd.f32 %v1581, %v1713
    %v1715 = vpop.f32.mrb[0].mxu0
    %v1716 = vpop.f32.mrb[0].mxu0
    %v1717 = vadd.f32 %v1581, %v1716
    %v1718 = vpop.f32.mrb[0].mxu0
    %1719 = vmatprep.mubr.bf16.mxu0 %v1515
    %1720 = vmatmul.mubr.bf16.gmra.mrb[0].mxu0 %v1514
    %v1721 = vpop.f32.mrb[0].mxu0
    %v1722 = vadd.f32 %v1581, %v1721
    %v1723 = vpop.f32.mrb[0].mxu0
    %v1724 = vpop.f32.mrb[0].mxu0
    %v1725 = vadd.f32 %v1581, %v1724
    %v1726 = vpop.f32.mrb[0].mxu0
    %1727 = vmatprep.mubr.bf16.mxu0 %v1517
    %1728 = vmatmul.mubr.bf16.gmra.mrb[0].mxu0 %v1516
    %v1729 = vpop.f32.mrb[0].mxu0
    %v1730 = vadd.f32 %v1581, %v1729
    %v1731 = vpop.f32.mrb[0].mxu0
    %v1732 = vpop.f32.mrb[0].mxu0
    %v1733 = vadd.f32 %v1581, %v1732
    %v1734 = vpop.f32.mrb[0].mxu0
    %1735 = vmatprep.mubr.bf16.mxu0 %v1519
    %1736 = vmatmul.mubr.bf16.gmra.mrb[0].mxu0 %v1518
    %v1737 = vpop.f32.mrb[0].mxu0
    %v1738 = vadd.f32 %v1581, %v1737
    %v1739 = vpop.f32.mrb[0].mxu0
    %v1740 = vpop.f32.mrb[0].mxu0
    %v1741 = vadd.f32 %v1581, %v1740
    %v1742 = vpop.f32.mrb[0].mxu0
    %1743 = vmatprep.mubr.bf16.mxu0 %v1521
    %1744 = vmatmul.mubr.bf16.gmra.mrb[0].mxu0 %v1520
    %v1745 = vpop.f32.mrb[0].mxu0
    %v1746 = vadd.f32 %v1581, %v1745
    %v1747 = vpop.f32.mrb[0].mxu0
    %v1748 = vpop.f32.mrb[0].mxu0
    %v1749 = vadd.f32 %v1581, %v1748
    %v1750 = vpop.f32.mrb[0].mxu0
    %1751 = vmatprep.mubr.bf16.mxu0 %v1523
    %1752 = vmatmul.mubr.bf16.gmra.mrb[0].mxu0 %v1522
    %v1753 = vpop.f32.mrb[0].mxu0
    %v1754 = vadd.f32 %v1581, %v1753
    %v1755 = vpop.f32.mrb[0].mxu0
    %v1756 = vpop.f32.mrb[0].mxu0
    %v1757 = vadd.f32 %v1581, %v1756
    %v1758 = vpop.f32.mrb[0].mxu0
    %1759 = vmatprep.mubr.bf16.mxu0 %v1525
    %1760 = vmatmul.mubr.bf16.gmra.mrb[0].mxu0 %v1524
    %v1761 = vpop.f32.mrb[0].mxu0
    %v1762 = vadd.f32 %v1581, %v1761
    %v1763 = vpop.f32.mrb[0].mxu0
    %v1764 = vpop.f32.mrb[0].mxu0
    %v1765 = vadd.f32 %v1581, %v1764
    %v1766 = vpop.f32.mrb[0].mxu0
    %1767 = vmatprep.mubr.bf16.mxu0 %v1527
    %1768 = vmatmul.mubr.bf16.gmra.mrb[0].mxu0 %v1526
    %v1769 = vpop.f32.mrb[0].mxu0
    %v1770 = vadd.f32 %v1581, %v1769
    %v1771 = vpop.f32.mrb[0].mxu0
    %v1772 = vpop.f32.mrb[0].mxu0
    %v1773 = vadd.f32 %v1581, %v1772
    %v1774 = vpop.f32.mrb[0].mxu0
    %1775 = vmatprep.mubr.bf16.mxu0 %v1529
    %1776 = vmatmul.mubr.bf16.gmra.mrb[0].mxu0 %v1528
    %v1777 = vpop.f32.mrb[0].mxu0
    %v1778 = vadd.f32 %v1581, %v1777
    %v1779 = vpop.f32.mrb[0].mxu0
    %v1780 = vpop.f32.mrb[0].mxu0
    %v1781 = vadd.f32 %v1581, %v1780
    %v1782 = vpop.f32.mrb[0].mxu0
    %1783 = vmatprep.mubr.bf16.mxu0 %v1531
    %1784 = vmatmul.mubr.bf16.gmra.mrb[0].mxu0 %v1530
    %v1785 = vpop.f32.mrb[0].mxu0
    %v1786 = vadd.f32 %v1581, %v1785
    %v1787 = vpop.f32.mrb[0].mxu0
    %v1788 = vpop.f32.mrb[0].mxu0
    %v1789 = vadd.f32 %v1581, %v1788
    %v1790 = vpop.f32.mrb[0].mxu0
    %1791 = vmatprep.mubr.bf16.mxu0 %v1533
    %1792 = vmatmul.mubr.bf16.gmra.mrb[0].mxu0 %v1532
    %v1793 = vpop.f32.mrb[0].mxu0
    %v1794 = vadd.f32 %v1581, %v1793
    %v1795 = vpop.f32.mrb[0].mxu0
    %v1796 = vpop.f32.mrb[0].mxu0
    %v1797 = vadd.f32 %v1581, %v1796
    %v1798 = vpop.f32.mrb[0].mxu0
    %1799 = vmatprep.mubr.bf16.mxu0 %v1535
    %1800 = vmatmul.mubr.bf16.gmra.mrb[0].mxu0 %v1534
    %v1801 = vpop.f32.mrb[0].mxu0
    %v1802 = vadd.f32 %v1581, %v1801
    %v1803 = vpop.f32.mrb[0].mxu0
    %v1804 = vpop.f32.mrb[0].mxu0
    %v1805 = vadd.f32 %v1581, %v1804
    %v1806 = vpop.f32.mrb[0].mxu0
    %1807 = vmatprep.mubr.bf16.mxu0 %v1537
    %1808 = vmatmul.mubr.bf16.gmra.mrb[0].mxu0 %v1536
    %v1809 = vpop.f32.mrb[0].mxu0
    %v1810 = vadd.f32 %v1581, %v1809
    %v1811 = vpop.f32.mrb[0].mxu0
    %v1812 = vpop.f32.mrb[0].mxu0
    %v1813 = vadd.f32 %v1581, %v1812
    %v1814 = vpop.f32.mrb[0].mxu0
    %1815 = vmatprep.mubr.bf16.mxu0 %v1539
    %1816 = vmatmul.mubr.bf16.gmra.mrb[0].mxu0 %v1538
    %v1817 = vpop.f32.mrb[0].mxu0
    %v1818 = vadd.f32 %v1581, %v1817
    %v1819 = vpop.f32.mrb[0].mxu0
    %v1820 = vpop.f32.mrb[0].mxu0
    %v1821 = vadd.f32 %v1581, %v1820
    %v1822 = vpop.f32.mrb[0].mxu0
    %1823 = vmatprep.mubr.bf16.mxu0 %v1541
    %1824 = vmatmul.mubr.bf16.gmra.mrb[0].mxu0 %v1540
    %v1825 = vpop.f32.mrb[0].mxu0
    %v1826 = vadd.f32 %v1581, %v1825
    %v1827 = vpop.f32.mrb[0].mxu0
    %v1828 = vpop.f32.mrb[0].mxu0
    %v1829 = vadd.f32 %v1581, %v1828
    %v1830 = vpop.f32.mrb[0].mxu0
    %1831 = vmatprep.mubr.bf16.mxu0 %v1543
    %1832 = vmatmul.mubr.bf16.gmra.mrb[0].mxu0 %v1542
    %v1833 = vpop.f32.mrb[0].mxu0
    %v1834 = vadd.f32 %v1581, %v1833
    %v1835 = vpop.f32.mrb[0].mxu0
    %v1836 = vpop.f32.mrb[0].mxu0
    %v1837 = vadd.f32 %v1581, %v1836
    %v1838 = vpop.f32.mrb[0].mxu0
    %1839 = vdwg.mxu0
    %1840 = vst [vmem:[#allocation10] sm:$0xff] %v1714
    %1841 = vst [vmem:[#allocation10 + $0x8] sm:$0xff] %v1717
    %1842 = vst [vmem:[#allocation10 + $0x10] sm:$0xff] %v1722
    %1843 = vst [vmem:[#allocation10 + $0x18] sm:$0xff] %v1725
    %1844 = vst [vmem:[#allocation10 + $0x20] sm:$0xff] %v1730
    %1845 = vst [vmem:[#allocation10 + $0x28] sm:$0xff] %v1733
    %1846 = vst [vmem:[#allocation10 + $0x30] sm:$0xff] %v1738
    %1847 = vst [vmem:[#allocation10 + $0x38] sm:$0xff] %v1741
    %1848 = vst [vmem:[#allocation10 + $0x40] sm:$0xff] %v1746
    %1849 = vst [vmem:[#allocation10 + $0x48] sm:$0xff] %v1749
    %1850 = vst [vmem:[#allocation10 + $0x50] sm:$0xff] %v1754
    %1851 = vst [vmem:[#allocation10 + $0x58] sm:$0xff] %v1757
    %1852 = vst [vmem:[#allocation10 + $0x60] sm:$0xff] %v1762
    %1853 = vst [vmem:[#allocation10 + $0x68] sm:$0xff] %v1765
    %1854 = vst [vmem:[#allocation10 + $0x70] sm:$0xff] %v1770
    %1855 = vst [vmem:[#allocation10 + $0x78] sm:$0xff] %v1773
    %1856 = vst [vmem:[#allocation10 + $0x80] sm:$0xff] %v1778
    %1857 = vst [vmem:[#allocation10 + $0x88] sm:$0xff] %v1781
    %1858 = vst [vmem:[#allocation10 + $0x90] sm:$0xff] %v1786
    %1859 = vst [vmem:[#allocation10 + $0x98] sm:$0xff] %v1789
    %1860 = vst [vmem:[#allocation10 + $0xa0] sm:$0xff] %v1794
    %1861 = vst [vmem:[#allocation10 + $0xa8] sm:$0xff] %v1797
    %1862 = vst [vmem:[#allocation10 + $0xb0] sm:$0xff] %v1802
    %1863 = vst [vmem:[#allocation10 + $0xb8] sm:$0xff] %v1805
    %1864 = vst [vmem:[#allocation10 + $0xc0] sm:$0xff] %v1810
    %1865 = vst [vmem:[#allocation10 + $0xc8] sm:$0xff] %v1813
    %1866 = vst [vmem:[#allocation10 + $0xd0] sm:$0xff] %v1818
    %1867 = vst [vmem:[#allocation10 + $0xd8] sm:$0xff] %v1821
    %1868 = vst [vmem:[#allocation10 + $0xe0] sm:$0xff] %v1826
    %1869 = vst [vmem:[#allocation10 + $0xe8] sm:$0xff] %v1829
    %1870 = vst [vmem:[#allocation10 + $0xf0] sm:$0xff] %v1834
    %1871 = vst [vmem:[#allocation10 + $0xf8] sm:$0xff] %v1837
    // Predicated region
    $region50: #{tpu_custom_call.1} parent=1 // pred_check
      _
    $region51: #{tpu_custom_call.1} parent=1 // pred_check_branch
      %1873 = sbr.rel (0) target = $region53
    $region52: #{tpu_custom_call.1} parent=1 // pred_region
      %s1875 = ssub.s32 4096, 4096
      %1876 = vsyncadd [#allocation4], %s1875
      %s1877 = sshll.u32 [#allocation10], 4
      %s1878 = int_to_ptr.vmem [resolvable:$true] %s1877
      %1883 = dma.vmem_to_hbm [thread:$0]  %s1878, 4096, %s8, [#allocation4], 128, 128, 8
    $region53: #{tpu_custom_call.1} parent=1 // pred_fallthru
      _
    // Predicated region
    $region54: #{tpu_custom_call.1} parent=1 // pred_check
      _
    $region55: #{tpu_custom_call.1} parent=1 // pred_check_branch
      %1885 = sbr.rel (0) target = $region57
    $region56: #{tpu_custom_call.1} parent=1 // pred_region
      %1886 = dma.done [#allocation4], 4096
    $region57: #{tpu_custom_call.1} parent=1 // pred_fallthru
      _
    %1887 = vsyncpa [#allocation3], 1
    %1888 = vsyncpa [#allocation6], 1
    %1889 = vsyncpa [#allocation9], 1
    %1890 = vsyncpa [#allocation4], 1

</llo_original>
